<compile_context>
chip_gen: v7x
topology: tpu7x:2x2x1
jax: 0.10.0
libtpu: 0.0.40
codegen_flags: <defaults>
</compile_context>

<pallas_src>
import functools
import math

import jax
import jax.numpy as jnp
from jax.experimental import pallas as pl
from jax.experimental.pallas import tpu as pltpu

# ---------------- model dims (small, consistent with the module) -------------
S = 8            # sequence length
E = 32           # embed_dim
H = 4            # num_heads
DH = E // H      # head dim
FF = 4 * E       # ff_hidden_dim (default embed_dim * 4) = 128
EPS = 1e-5       # nn.LayerNorm default eps
LANES = 128


def _layernorm(x, g, b):
    mean = jnp.mean(x, axis=-1, keepdims=True)
    var = jnp.mean((x - mean) ** 2, axis=-1, keepdims=True)
    return (x - mean) * jax.lax.rsqrt(var + EPS) * g + b


def _gelu_exact(x):
    # nn.GELU() default: exact erf formulation
    return 0.5 * x * (1.0 + jax.lax.erf(x * (1.0 / math.sqrt(2.0))))


def encoder_layer_kernel(x_ref, mask_ref, w_attn_ref, w_ffn_ref, vec_ref,
                         out_ref, *, tb):
    """One grid step: a slab of `tb` whole sequences (m = tb*S tokens)."""
    m = tb * S
    wdt = w_attn_ref.dtype                   # matmul operand dtype (f32 or bf16)

    x2 = x_ref[...]                           # (m, E) f32
    vec = vec_ref[...]                        # (8, 128) packed bias / LN slab

    b_qkv = vec[0:1, 0:3 * E]                 # (1, 3E)
    b_o = vec[1:2, 0:E]
    b_1 = vec[2:3, :]                         # (1, FF)
    b_2 = vec[3:4, 0:E]
    ln1_g, ln1_b = vec[4:5, 0:E], vec[5:6, 0:E]
    ln2_g, ln2_b = vec[6:7, 0:E], vec[7:8, 0:E]

    # ---- fused QKV projection: one lane-dense (m,E)@(E,3E) MXU push ----
    qkv = jnp.dot(x2.astype(wdt), w_attn_ref[:, 0:3 * E],
                  preferred_element_type=jnp.float32) + b_qkv            # (m, 3E)

    q = qkv[:, 0:E].reshape(tb, S, E)
    k = qkv[:, E:2 * E].reshape(tb, S, E)
    v = qkv[:, 2 * E:3 * E].reshape(tb, S, E)

    # ---- heads-as-batch attention (single leading batch dim = tb*H) ----
    # K/V are lane-masked per head, so contracting over the full E lanes gives
    # exactly the per-head DH contraction; one softmax covers every head.
    gb = tb * H

    def rep_heads(t):                         # (tb, S, E) -> (tb*H, S, E)
        return jnp.broadcast_to(t[:, None, :, :], (tb, H, S, E)).reshape(gb, S, E)

    mask_g = jnp.broadcast_to(mask_ref[...].reshape(H, S, E)[None],
                              (tb, H, S, E)).reshape(gb, S, E)            # 0/1 f32

    q_g = rep_heads(q)
    k_g = rep_heads(k) * mask_g
    v_g = rep_heads(v) * mask_g

    scale = 1.0 / math.sqrt(DH)
    s = jnp.einsum("gqe,gke->gqk", q_g, k_g,
                   preferred_element_type=jnp.float32) * scale           # (gb,S,S)
    s = s - jnp.max(s, axis=-1, keepdims=True)
    p = jnp.exp(s)
    # exact softmax normalization (approx EUP reciprocal removed on purpose)
    p = p / jnp.sum(p, axis=-1, keepdims=True)
    ctx = jnp.einsum("gqk,gke->gqe", p, v_g,
                     preferred_element_type=jnp.float32)                  # (gb,S,E)

    # per-head context occupies disjoint lane blocks -> summing over the head
    # axis reconstructs the concatenated head outputs exactly; the output
    # projection is then a single lane-dense (m,E)@(E,E) dot.
    ctx = ctx.reshape(tb, H, S, E).sum(axis=1).reshape(m, E)
    attn = jnp.dot(ctx.astype(wdt), w_attn_ref[:, 3 * E:4 * E],
                   preferred_element_type=jnp.float32) + b_o              # (m, E)

    # ---- residual + LayerNorm1 (dropout == identity in eval) ----
    h1 = _layernorm(x2 + attn, ln1_g, ln1_b)

    # ---- feed-forward: Linear -> GELU(exact erf) -> Linear ----
    ff = jnp.dot(h1.astype(wdt), w_ffn_ref[0:E, :],
                 preferred_element_type=jnp.float32) + b_1                # (m, FF)
    ff = _gelu_exact(ff)
    # second FFN weight stored transposed -> NT matmul (contract dim 1 / dim 1)
    ff = jax.lax.dot_general(ff.astype(wdt), w_ffn_ref[E:2 * E, :],
                             dimension_numbers=(((1,), (1,)), ((), ())),
                             preferred_element_type=jnp.float32) + b_2    # (m, E)

    # ---- residual + LayerNorm2 ----
    out_ref[...] = _layernorm(h1 + ff, ln2_g, ln2_b).astype(out_ref.dtype)


def pack_params(params, matmul_dtype=jnp.float32):
    """One-time packing of the 16 PyTorch-style params into 3 lane-dense slabs.

    matmul_dtype=jnp.bfloat16 halves weight DMA bytes and feeds the MXU bf16
    operands on v6e/v7x; accumulation and all elementwise math remain f32.
    """
    (wq, bq, wk, bk, wv, bv, wo, bo,
     ln1_g, ln1_b, w1, b1, w2, b2, ln2_g, ln2_b) = params

    w_attn = jnp.concatenate([wq, wk, wv, wo], axis=1).astype(matmul_dtype)   # (E, 4E)
    w_ffn = jnp.concatenate([w1, w2.T], axis=0).astype(matmul_dtype)          # (2E, FF)

    def row(vv):
        vv = vv.reshape(-1).astype(jnp.float32)
        return jnp.pad(vv, (0, LANES - vv.shape[0]))

    vecs = jnp.stack([
        row(jnp.concatenate([bq.reshape(-1), bk.reshape(-1), bv.reshape(-1)])),
        row(bo), row(b1), row(b2),
        row(ln1_g), row(ln1_b), row(ln2_g), row(ln2_b),
    ])                                                                     # (8, 128)
    return w_attn, w_ffn, vecs


def _head_mask():
    # (H*S, E) 0/1 mask: rows h*S..h*S+S-1 select head h's DH-wide lane block.
    he = (jnp.arange(E)[None, :] // DH == jnp.arange(H)[:, None]).astype(jnp.float32)
    return jnp.broadcast_to(he[:, None, :], (H, S, E)).reshape(H * S, E)


def transformer_encoder_layer(x, packed, *, seqs_per_block=8):
    """x: (B, S, E) float32.  packed: output of pack_params."""
    w_attn, w_ffn, vecs = packed
    bsz, s_len, e_dim = x.shape
    assert s_len == S and e_dim == E

    # sequences per grid step (attention never crosses a sequence boundary)
    tb = seqs_per_block if (seqs_per_block and bsz % seqs_per_block == 0) else bsz
    num_blocks = bsz // tb
    m = tb * S

    x2 = x.reshape(bsz * S, E)
    mask = _head_mask()

    # constant index_map -> fetched once, VMEM-resident across all grid steps
    resident = lambda a: pl.BlockSpec(a.shape, lambda i: (0, 0))

    out2 = pl.pallas_call(
        functools.partial(encoder_layer_kernel, tb=tb),
        out_shape=jax.ShapeDtypeStruct((bsz * S, E), jnp.float32),
        grid_spec=pltpu.PrefetchScalarGridSpec(
            num_scalar_prefetch=0,
            grid=(num_blocks,),
            in_specs=[pl.BlockSpec((m, E), lambda i: (i, 0)),     # token slab / step
                      resident(mask), resident(w_attn),
                      resident(w_ffn), resident(vecs)],
            out_specs=pl.BlockSpec((m, E), lambda i: (i, 0)),
        ),
        compiler_params=pltpu.CompilerParams(
            # independent sequence blocks -> megacore-shardable on v7x
            dimension_semantics=("parallel",),
            # explicit budget; tiny here, but sized against v7x's 64 MiB VMEM
            vmem_limit_bytes=32 * 1024 * 1024,
        ),
    )(x2, mask, w_attn, w_ffn, vecs)
    return out2.reshape(bsz, S, E)


def reference(x, params):
    (wq, bq, wk, bk, wv, bv, wo, bo,
     ln1_g, ln1_b, w1, b1, w2, b2, ln2_g, ln2_b) = params
    bsz = x.shape[0]

    def ln(y, g, b):
        mm = jnp.mean(y, axis=-1, keepdims=True)
        vv = jnp.mean((y - mm) ** 2, axis=-1, keepdims=True)
        return (y - mm) / jnp.sqrt(vv + EPS) * g + b

    q = x @ wq + bq
    k = x @ wk + bk
    v = x @ wv + bv
    q = q.reshape(bsz, S, H, DH).transpose(0, 2, 1, 3)
    k = k.reshape(bsz, S, H, DH).transpose(0, 2, 1, 3)
    v = v.reshape(bsz, S, H, DH).transpose(0, 2, 1, 3)
    sc = jnp.einsum("bhqd,bhkd->bhqk", q, k) / math.sqrt(DH)
    p = jax.nn.softmax(sc, axis=-1)
    a = jnp.einsum("bhqk,bhkd->bhqd", p, v).transpose(0, 2, 1, 3).reshape(bsz, S, E)
    attn_out = a @ wo + bo
    h1 = ln(x + attn_out, ln1_g, ln1_b)
    ff = jax.nn.gelu(h1 @ w1 + b1, approximate=False) @ w2 + b2
    return ln(h1 + ff, ln2_g, ln2_b)


if __name__ == "__main__":
    key = jax.random.PRNGKey(0)
    ks = jax.random.split(key, 8)

    def lin(k, fan_in, fan_out):
        bound = 1.0 / math.sqrt(fan_in)
        kw, kb = jax.random.split(k)
        w = jax.random.uniform(kw, (fan_in, fan_out), jnp.float32, -bound, bound)
        b = jax.random.uniform(kb, (1, fan_out), jnp.float32, -bound, bound)
        return w, b

    wq, bq = lin(ks[0], E, E)
    wk, bk = lin(ks[1], E, E)
    wv, bv = lin(ks[2], E, E)
    wo, bo = lin(ks[3], E, E)
    w1, b1 = lin(ks[4], E, FF)
    w2, b2 = lin(ks[5], FF, E)
    ln1_g = jnp.ones((1, E), jnp.float32)
    ln1_b = jnp.zeros((1, E), jnp.float32)
    ln2_g = jnp.ones((1, E), jnp.float32)
    ln2_b = jnp.zeros((1, E), jnp.float32)

    params = (wq, bq, wk, bk, wv, bv, wo, bo,
              ln1_g, ln1_b, w1, b1, w2, b2, ln2_g, ln2_b)

    # ---- 1) spec-sized input (B=2, S=8, E=32), f32 weights: tight check ----
    x_small = jax.random.normal(ks[6], (2, S, E), jnp.float32)
    packed_f32 = jax.tree.map(jax.block_until_ready,
                              pack_params(params, jnp.float32))
    out = jax.block_until_ready(transformer_encoder_layer(x_small, packed_f32))
    ref = reference(x_small, params)
    assert jnp.allclose(out, ref, atol=5e-4, rtol=5e-4), \
        float(jnp.max(jnp.abs(out - ref)))

    # ---- 2) many sequences per call: grid=(4,) parallel, weights resident ----
    x_big = jax.random.normal(ks[7], (32, S, E), jnp.float32)
    out_b = jax.block_until_ready(
        transformer_encoder_layer(x_big, packed_f32, seqs_per_block=8))
    ref_b = reference(x_big, params)
    assert jnp.allclose(out_b, ref_b, atol=5e-4, rtol=5e-4), \
        float(jnp.max(jnp.abs(out_b - ref_b)))

    # ---- 3) bf16 matmul operands (v6e/v7x), f32 accumulate: loose check ----
    packed_bf16 = jax.tree.map(jax.block_until_ready,
                               pack_params(params, jnp.bfloat16))
    out_h = jax.block_until_ready(
        transformer_encoder_layer(x_big, packed_bf16, seqs_per_block=8))
    assert jnp.allclose(out_h, ref_b, atol=3e-2, rtol=3e-2), \
        float(jnp.max(jnp.abs(out_h - ref_b)))

    print("KERNEL_OK")
</pallas_src>

<mosaic_0001>
module attributes {stable_mosaic.version = 11 : i64} {
  func.func @encoder_layer_kernel(%arg0: i32, %arg1: memref<16x32xf32, #tpu.memory_space<vmem>>, %arg2: memref<32x32xf32, #tpu.memory_space<vmem>>, %arg3: memref<32x128xf32, #tpu.memory_space<vmem>>, %arg4: memref<64x128xf32, #tpu.memory_space<vmem>>, %arg5: memref<8x128xf32, #tpu.memory_space<vmem>>, %arg6: memref<16x32xf32, #tpu.memory_space<vmem>>) attributes {dimension_semantics = [#tpu.dimension_semantics<parallel>], iteration_bounds = array<i64: 1>, scalar_prefetch = 0 : i64, scratch_operands = 0 : i64, tpu.core_type = #tpu.core_type<tc>, window_params = [{transform_indices = @transform_0, window_bounds = array<i64: 16, 32>}, {pipeline_mode = #tpu.pipeline_mode<synchronous>, transform_indices = @transform_1, window_bounds = array<i64: 32, 32>}, {pipeline_mode = #tpu.pipeline_mode<synchronous>, transform_indices = @transform_2, window_bounds = array<i64: 32, 128>}, {pipeline_mode = #tpu.pipeline_mode<synchronous>, transform_indices = @transform_3, window_bounds = array<i64: 64, 128>}, {pipeline_mode = #tpu.pipeline_mode<synchronous>, transform_indices = @transform_4, window_bounds = array<i64: 8, 128>}, {transform_indices = @transform_5, window_bounds = array<i64: 16, 32>}]} {
    %c0 = arith.constant 0 : index
    %c0_0 = arith.constant 0 : index
    %0 = vector.load %arg1[%c0, %c0_0] : memref<16x32xf32, #tpu.memory_space<vmem>>, vector<16x32xf32>
    %c0_1 = arith.constant 0 : index
    %c0_2 = arith.constant 0 : index
    %1 = vector.load %arg5[%c0_1, %c0_2] : memref<8x128xf32, #tpu.memory_space<vmem>>, vector<8x128xf32>
    %2 = vector.extract_strided_slice %1 {offsets = [0, 0], sizes = [1, 96], strides = [1, 1]} : vector<8x128xf32> to vector<1x96xf32>
    %3 = vector.extract_strided_slice %1 {offsets = [1, 0], sizes = [1, 32], strides = [1, 1]} : vector<8x128xf32> to vector<1x32xf32>
    %4 = vector.extract_strided_slice %1 {offsets = [2, 0], sizes = [1, 128], strides = [1, 1]} : vector<8x128xf32> to vector<1x128xf32>
    %5 = vector.extract_strided_slice %1 {offsets = [3, 0], sizes = [1, 32], strides = [1, 1]} : vector<8x128xf32> to vector<1x32xf32>
    %6 = vector.extract_strided_slice %1 {offsets = [4, 0], sizes = [1, 32], strides = [1, 1]} : vector<8x128xf32> to vector<1x32xf32>
    %7 = vector.extract_strided_slice %1 {offsets = [5, 0], sizes = [1, 32], strides = [1, 1]} : vector<8x128xf32> to vector<1x32xf32>
    %8 = vector.extract_strided_slice %1 {offsets = [6, 0], sizes = [1, 32], strides = [1, 1]} : vector<8x128xf32> to vector<1x32xf32>
    %9 = vector.extract_strided_slice %1 {offsets = [7, 0], sizes = [1, 32], strides = [1, 1]} : vector<8x128xf32> to vector<1x32xf32>
    %c0_3 = arith.constant 0 : index
    %c0_4 = arith.constant 0 : index
    %10 = vector.load %arg3[%c0_3, %c0_4] : memref<32x128xf32, #tpu.memory_space<vmem>>, vector<32x96xf32>
    %cst = arith.constant dense<0.000000e+00> : vector<16x96xf32>
    %11 = tpu.matmul %0, %10, %cst {dimension_numbers = #tpu.dot_dimension_numbers<[1], [0], [0], [1], [0, 0, 1, 1], [], []>} : vector<16x32xf32>, vector<32x96xf32>, vector<16x96xf32> -> vector<16x96xf32>
    %12 = vector.broadcast %2 : vector<1x96xf32> to vector<16x96xf32>
    %13 = arith.addf %11, %12 : vector<16x96xf32>
    %14 = vector.extract_strided_slice %13 {offsets = [0, 0], sizes = [16, 32], strides = [1, 1]} : vector<16x96xf32> to vector<16x32xf32>
    %15 = vector.shape_cast %14 : vector<16x32xf32> to vector<2x8x32xf32>
    %16 = vector.extract_strided_slice %13 {offsets = [0, 32], sizes = [16, 32], strides = [1, 1]} : vector<16x96xf32> to vector<16x32xf32>
    %17 = vector.shape_cast %16 : vector<16x32xf32> to vector<2x8x32xf32>
    %18 = vector.extract_strided_slice %13 {offsets = [0, 64], sizes = [16, 32], strides = [1, 1]} : vector<16x96xf32> to vector<16x32xf32>
    %19 = vector.shape_cast %18 : vector<16x32xf32> to vector<2x8x32xf32>
    %c0_5 = arith.constant 0 : index
    %c0_6 = arith.constant 0 : index
    %20 = vector.load %arg2[%c0_5, %c0_6] : memref<32x32xf32, #tpu.memory_space<vmem>>, vector<32x32xf32>
    %21 = vector.shape_cast %20 : vector<32x32xf32> to vector<4x8x32xf32>
    %22 = vector.shape_cast %21 : vector<4x8x32xf32> to vector<1x4x8x32xf32>
    %23 = vector.shape_cast %22 : vector<1x4x8x32xf32> to vector<1x4x8x32xf32>
    %24 = vector.broadcast %23 : vector<1x4x8x32xf32> to vector<2x4x8x32xf32>
    %25 = vector.shape_cast %24 : vector<2x4x8x32xf32> to vector<8x8x32xf32>
    %26 = vector.shape_cast %15 : vector<2x8x32xf32> to vector<2x1x8x32xf32>
    %27 = vector.shape_cast %26 : vector<2x1x8x32xf32> to vector<2x1x8x32xf32>
    %28 = vector.broadcast %27 : vector<2x1x8x32xf32> to vector<2x4x8x32xf32>
    %29 = vector.shape_cast %28 : vector<2x4x8x32xf32> to vector<8x8x32xf32>
    %30 = vector.shape_cast %17 : vector<2x8x32xf32> to vector<2x1x8x32xf32>
    %31 = vector.shape_cast %30 : vector<2x1x8x32xf32> to vector<2x1x8x32xf32>
    %32 = vector.broadcast %31 : vector<2x1x8x32xf32> to vector<2x4x8x32xf32>
    %33 = vector.shape_cast %32 : vector<2x4x8x32xf32> to vector<8x8x32xf32>
    %34 = arith.mulf %33, %25 : vector<8x8x32xf32>
    %35 = vector.shape_cast %19 : vector<2x8x32xf32> to vector<2x1x8x32xf32>
    %36 = vector.shape_cast %35 : vector<2x1x8x32xf32> to vector<2x1x8x32xf32>
    %37 = vector.broadcast %36 : vector<2x1x8x32xf32> to vector<2x4x8x32xf32>
    %38 = vector.shape_cast %37 : vector<2x4x8x32xf32> to vector<8x8x32xf32>
    %39 = arith.mulf %38, %25 : vector<8x8x32xf32>
    "tpu.trace_start"() <{level = 10 : i32, message = "gqe,gke->gqk"}> : () -> ()
    %cst_7 = arith.constant dense<0.000000e+00> : vector<8x8x8xf32>
    %40 = tpu.matmul %29, %34, %cst_7 {dimension_numbers = #tpu.dot_dimension_numbers<[2], [2], [1], [1], [0, 0, 0, 1, 1, 1], [0], [0]>} : vector<8x8x32xf32>, vector<8x8x32xf32>, vector<8x8x8xf32> -> vector<8x8x8xf32>
    "tpu.trace_stop"() : () -> ()
    %cst_8 = arith.constant 0.353553385 : f32
    %41 = vector.broadcast %cst_8 : f32 to vector<8x8x8xf32>
    %42 = arith.mulf %40, %41 : vector<8x8x8xf32>
    %cst_9 = arith.constant dense<0xFF800000> : vector<8x8xf32>
    %43 = vector.multi_reduction <maximumf>, %42, %cst_9 [2] : vector<8x8x8xf32> to vector<8x8xf32>
    %44 = vector.shape_cast %43 : vector<8x8xf32> to vector<8x8x1xf32>
    %45 = vector.broadcast %44 : vector<8x8x1xf32> to vector<8x8x8xf32>
    %46 = arith.subf %42, %45 : vector<8x8x8xf32>
    %47 = math.exp %46 : vector<8x8x8xf32>
    %cst_10 = arith.constant dense<0.000000e+00> : vector<8x8xf32>
    %48 = vector.multi_reduction <add>, %47, %cst_10 [2] : vector<8x8x8xf32> to vector<8x8xf32>
    %49 = vector.shape_cast %48 : vector<8x8xf32> to vector<8x8x1xf32>
    %50 = vector.broadcast %49 : vector<8x8x1xf32> to vector<8x8x8xf32>
    %51 = arith.divf %47, %50 : vector<8x8x8xf32>
    "tpu.trace_start"() <{level = 10 : i32, message = "gqk,gke->gqe"}> : () -> ()
    %cst_11 = arith.constant dense<0.000000e+00> : vector<8x8x32xf32>
    %52 = tpu.matmul %51, %39, %cst_11 {dimension_numbers = #tpu.dot_dimension_numbers<[2], [1], [1], [2], [0, 0, 0, 1, 1, 2], [0], [0]>} : vector<8x8x8xf32>, vector<8x8x32xf32>, vector<8x8x32xf32> -> vector<8x8x32xf32>
    "tpu.trace_stop"() : () -> ()
    %53 = vector.shape_cast %52 : vector<8x8x32xf32> to vector<2x4x8x32xf32>
    %cst_12 = arith.constant dense<0.000000e+00> : vector<2x8x32xf32>
    %54 = vector.multi_reduction <add>, %53, %cst_12 [1] : vector<2x4x8x32xf32> to vector<2x8x32xf32>
    %55 = vector.shape_cast %54 : vector<2x8x32xf32> to vector<16x32xf32>
    %c0_13 = arith.constant 0 : index
    %c96 = arith.constant 96 : index
    %56 = vector.load %arg3[%c0_13, %c96] : memref<32x128xf32, #tpu.memory_space<vmem>>, vector<32x32xf32>
    %cst_14 = arith.constant dense<0.000000e+00> : vector<16x32xf32>
    %57 = tpu.matmul %55, %56, %cst_14 {dimension_numbers = #tpu.dot_dimension_numbers<[1], [0], [0], [1], [0, 0, 1, 1], [], []>} : vector<16x32xf32>, vector<32x32xf32>, vector<16x32xf32> -> vector<16x32xf32>
    %58 = vector.broadcast %3 : vector<1x32xf32> to vector<16x32xf32>
    %59 = arith.addf %57, %58 : vector<16x32xf32>
    %60 = arith.addf %0, %59 : vector<16x32xf32>
    %cst_15 = arith.constant dense<0.000000e+00> : vector<16xf32>
    %61 = vector.multi_reduction <add>, %60, %cst_15 [1] : vector<16x32xf32> to vector<16xf32>
    %62 = vector.shape_cast %61 : vector<16xf32> to vector<16x1xf32>
    %cst_16 = arith.constant 3.200000e+01 : f32
    %63 = vector.broadcast %cst_16 : f32 to vector<16x1xf32>
    %64 = arith.divf %62, %63 : vector<16x1xf32>
    %65 = vector.broadcast %64 : vector<16x1xf32> to vector<16x32xf32>
    %66 = arith.subf %60, %65 : vector<16x32xf32>
    %67 = arith.mulf %66, %66 : vector<16x32xf32>
    %cst_17 = arith.constant dense<0.000000e+00> : vector<16xf32>
    %68 = vector.multi_reduction <add>, %67, %cst_17 [1] : vector<16x32xf32> to vector<16xf32>
    %69 = vector.shape_cast %68 : vector<16xf32> to vector<16x1xf32>
    %cst_18 = arith.constant 3.200000e+01 : f32
    %70 = vector.broadcast %cst_18 : f32 to vector<16x1xf32>
    %71 = arith.divf %69, %70 : vector<16x1xf32>
    %72 = vector.broadcast %64 : vector<16x1xf32> to vector<16x32xf32>
    %73 = arith.subf %60, %72 : vector<16x32xf32>
    %cst_19 = arith.constant 9.99999974E-6 : f32
    %74 = vector.broadcast %cst_19 : f32 to vector<16x1xf32>
    %75 = arith.addf %71, %74 : vector<16x1xf32>
    %76 = math.rsqrt %75 : vector<16x1xf32>
    %77 = vector.broadcast %76 : vector<16x1xf32> to vector<16x32xf32>
    %78 = arith.mulf %73, %77 : vector<16x32xf32>
    %79 = vector.broadcast %6 : vector<1x32xf32> to vector<16x32xf32>
    %80 = arith.mulf %78, %79 : vector<16x32xf32>
    %81 = vector.broadcast %7 : vector<1x32xf32> to vector<16x32xf32>
    %82 = arith.addf %80, %81 : vector<16x32xf32>
    %c0_20 = arith.constant 0 : index
    %c0_21 = arith.constant 0 : index
    %83 = vector.load %arg4[%c0_20, %c0_21] : memref<64x128xf32, #tpu.memory_space<vmem>>, vector<32x128xf32>
    %cst_22 = arith.constant dense<0.000000e+00> : vector<16x128xf32>
    %84 = tpu.matmul %82, %83, %cst_22 {dimension_numbers = #tpu.dot_dimension_numbers<[1], [0], [0], [1], [0, 0, 1, 1], [], []>} : vector<16x32xf32>, vector<32x128xf32>, vector<16x128xf32> -> vector<16x128xf32>
    %85 = vector.broadcast %4 : vector<1x128xf32> to vector<16x128xf32>
    %86 = arith.addf %84, %85 : vector<16x128xf32>
    %cst_23 = arith.constant 5.000000e-01 : f32
    %87 = vector.broadcast %cst_23 : f32 to vector<16x128xf32>
    %88 = arith.mulf %87, %86 : vector<16x128xf32>
    %cst_24 = arith.constant 0.707106769 : f32
    %89 = vector.broadcast %cst_24 : f32 to vector<16x128xf32>
    %90 = arith.mulf %86, %89 : vector<16x128xf32>
    %91 = math.erf %90 : vector<16x128xf32>
    %cst_25 = arith.constant 1.000000e+00 : f32
    %92 = vector.broadcast %cst_25 : f32 to vector<16x128xf32>
    %93 = arith.addf %92, %91 : vector<16x128xf32>
    %94 = arith.mulf %88, %93 : vector<16x128xf32>
    %c32 = arith.constant 32 : index
    %c0_26 = arith.constant 0 : index
    %95 = vector.load %arg4[%c32, %c0_26] : memref<64x128xf32, #tpu.memory_space<vmem>>, vector<32x128xf32>
    %cst_27 = arith.constant dense<0.000000e+00> : vector<16x32xf32>
    %96 = tpu.matmul %94, %95, %cst_27 {dimension_numbers = #tpu.dot_dimension_numbers<[1], [1], [0], [0], [0, 0, 1, 0], [], []>} : vector<16x128xf32>, vector<32x128xf32>, vector<16x32xf32> -> vector<16x32xf32>
    %97 = vector.broadcast %5 : vector<1x32xf32> to vector<16x32xf32>
    %98 = arith.addf %96, %97 : vector<16x32xf32>
    %99 = arith.addf %82, %98 : vector<16x32xf32>
    %cst_28 = arith.constant dense<0.000000e+00> : vector<16xf32>
    %100 = vector.multi_reduction <add>, %99, %cst_28 [1] : vector<16x32xf32> to vector<16xf32>
    %101 = vector.shape_cast %100 : vector<16xf32> to vector<16x1xf32>
    %cst_29 = arith.constant 3.200000e+01 : f32
    %102 = vector.broadcast %cst_29 : f32 to vector<16x1xf32>
    %103 = arith.divf %101, %102 : vector<16x1xf32>
    %104 = vector.broadcast %103 : vector<16x1xf32> to vector<16x32xf32>
    %105 = arith.subf %99, %104 : vector<16x32xf32>
    %106 = arith.mulf %105, %105 : vector<16x32xf32>
    %cst_30 = arith.constant dense<0.000000e+00> : vector<16xf32>
    %107 = vector.multi_reduction <add>, %106, %cst_30 [1] : vector<16x32xf32> to vector<16xf32>
    %108 = vector.shape_cast %107 : vector<16xf32> to vector<16x1xf32>
    %cst_31 = arith.constant 3.200000e+01 : f32
    %109 = vector.broadcast %cst_31 : f32 to vector<16x1xf32>
    %110 = arith.divf %108, %109 : vector<16x1xf32>
    %111 = vector.broadcast %103 : vector<16x1xf32> to vector<16x32xf32>
    %112 = arith.subf %99, %111 : vector<16x32xf32>
    %cst_32 = arith.constant 9.99999974E-6 : f32
    %113 = vector.broadcast %cst_32 : f32 to vector<16x1xf32>
    %114 = arith.addf %110, %113 : vector<16x1xf32>
    %115 = math.rsqrt %114 : vector<16x1xf32>
    %116 = vector.broadcast %115 : vector<16x1xf32> to vector<16x32xf32>
    %117 = arith.mulf %112, %116 : vector<16x32xf32>
    %118 = vector.broadcast %8 : vector<1x32xf32> to vector<16x32xf32>
    %119 = arith.mulf %117, %118 : vector<16x32xf32>
    %120 = vector.broadcast %9 : vector<1x32xf32> to vector<16x32xf32>
    %121 = arith.addf %119, %120 : vector<16x32xf32>
    %c0_33 = arith.constant 0 : index
    %c0_34 = arith.constant 0 : index
    %122 = vector.load %arg6[%c0_33, %c0_34] : memref<16x32xf32, #tpu.memory_space<vmem>>, vector<16x32xf32>
    tpu.vector_store %arg6[%c0_33, %c0_34], %121 {strides = array<i32>} : memref<16x32xf32, #tpu.memory_space<vmem>>, vector<16x32xf32>,
    return
  }
  func.func @transform_0(%arg0: i32) -> (i32, i32) {
    %c0_i32 = arith.constant 0 : i32
    %c0_i32_0 = arith.constant 0 : i32
    return %arg0, %c0_i32 : i32, i32
  }
  func.func @transform_1(%arg0: i32) -> (i32, i32) {
    %c0_i32 = arith.constant 0 : i32
    %c0_i32_0 = arith.constant 0 : i32
    %c0_i32_1 = arith.constant 0 : i32
    return %c0_i32, %c0_i32_0 : i32, i32
  }
  func.func @transform_2(%arg0: i32) -> (i32, i32) {
    %c0_i32 = arith.constant 0 : i32
    %c0_i32_0 = arith.constant 0 : i32
    %c0_i32_1 = arith.constant 0 : i32
    return %c0_i32, %c0_i32_0 : i32, i32
  }
  func.func @transform_3(%arg0: i32) -> (i32, i32) {
    %c0_i32 = arith.constant 0 : i32
    %c0_i32_0 = arith.constant 0 : i32
    %c0_i32_1 = arith.constant 0 : i32
    return %c0_i32, %c0_i32_0 : i32, i32
  }
  func.func @transform_4(%arg0: i32) -> (i32, i32) {
    %c0_i32 = arith.constant 0 : i32
    %c0_i32_0 = arith.constant 0 : i32
    %c0_i32_1 = arith.constant 0 : i32
    return %c0_i32, %c0_i32_0 : i32, i32
  }
  func.func @transform_5(%arg0: i32) -> (i32, i32) {
    %c0_i32 = arith.constant 0 : i32
    %c0_i32_0 = arith.constant 0 : i32
    return %arg0, %c0_i32 : i32, i32
  }
}

</mosaic_0001>

<llo_original>
// kernel: tpu_custom_call.1
$region0: #{tpu_custom_call.1}
  #allocation0 [shape = 'u32[]', space=smem, size = 0x4, offset = 0x4, fixed_abs, tag = 'smem constant byte address 0x4 - core index']
  #allocation1 [shape = 'u32[144,128]{1,0:T(1,128)}', space=vmem, size = 0x12000, scoped, tag = 'internal scratch']
  %s0 = inlined_call_operand.hbm [shape: f32[16,32], index: 0, kind: input, shape index: {}]
  %s1 = inlined_call_operand.hbm [shape: f32[32,32], index: 1, kind: input, shape index: {}]
  %s2 = inlined_call_operand.hbm [shape: f32[32,128], index: 2, kind: input, shape index: {}]
  %s3 = inlined_call_operand.hbm [shape: f32[64,128], index: 3, kind: input, shape index: {}]
  %s4 = inlined_call_operand.vmem [shape: f32[8,128], index: 4, kind: input, shape index: {}]
  %s5 = inlined_call_operand.hbm [shape: f32[16,32], index: 5, kind: output, shape index: {}]
  %s6 = sld [smem:[#allocation0]]
  $region46: #{tpu_custom_call.1} parent=0
    _
  %s8 = ssub.s32 1, %s6
  %s9 = scalar_select 0, %s8, %s6
  $region1: #{tpu_custom_call.1} parent=0
    #allocation2 [shape = 'u8[8192]{0}', space=vmem, size = 0x2000, scoped, tag = 'input window, operand 0, single buffered']
    #allocation3 [shape = 's32[1]{0}', space=sflag, size = 0x4, scoped, tag = 'scoped memory for tpu_custom_call.1']
    #allocation4 [shape = 's32[1]{0}', space=sflag, size = 0x4, scoped, tag = 'scoped memory for tpu_custom_call.1']
    #allocation5 [shape = 'u8[16384]{0}', space=vmem, size = 0x4000, scoped, tag = 'input window, operand 1, single buffered']
    #allocation6 [shape = 's32[1]{0}', space=sflag, size = 0x4, scoped, tag = 'scoped memory for tpu_custom_call.1']
    #allocation7 [shape = 'u8[16384]{0}', space=vmem, size = 0x4000, scoped, tag = 'input window, operand 2, single buffered']
    #allocation8 [shape = 'u8[32768]{0}', space=vmem, size = 0x8000, scoped, tag = 'input window, operand 3, single buffered']
    #allocation9 [shape = 's32[1]{0}', space=sflag, size = 0x4, scoped, tag = 'scoped memory for tpu_custom_call.1']
    #allocation10 [shape = 'u8[8192]{0}', space=vmem, size = 0x2000, scoped, tag = 'output window, operand 0, single buffered']
    %10 = vsyncpa [#allocation3], 0
    %11 = vsyncpa [#allocation6], 0
    %12 = vsyncpa [#allocation9], 0
    %13 = vsyncpa [#allocation4], 0
    // Predicated region
    $region2: #{tpu_custom_call.1} parent=1 // pred_check
      _
    $region3: #{tpu_custom_call.1} parent=1 // pred_check_branch
      %15 = sbr.rel (0) target = $region5
    $region4: #{tpu_custom_call.1} parent=1 // pred_region
      %s17 = ssub.s32 256, 256
      %18 = vsyncadd [#allocation3], %s17
      %s19 = sshll.u32 [#allocation2], 4
      %s20 = int_to_ptr.vmem [resolvable:$true] %s19
      %25 = dma.hbm_to_vmem [thread:$0]  %s0, 256, %s20, [#allocation3], 128, 128, 8
    $region5: #{tpu_custom_call.1} parent=1 // pred_fallthru
      _
    // Predicated region
    $region6: #{tpu_custom_call.1} parent=1 // pred_check
      _
    $region7: #{tpu_custom_call.1} parent=1 // pred_check_branch
      %27 = sbr.rel (0) target = $region9
    $region8: #{tpu_custom_call.1} parent=1 // pred_region
      %s29 = ssub.s32 512, 512
      %30 = vsyncadd [#allocation6], %s29
      %s31 = sshll.u32 [#allocation5], 4
      %s32 = int_to_ptr.vmem [resolvable:$true] %s31
      %37 = dma.hbm_to_vmem [thread:$0]  %s1, 512, %s32, [#allocation6], 128, 128, 8
    $region9: #{tpu_custom_call.1} parent=1 // pred_fallthru
      _
    // Predicated region
    $region10: #{tpu_custom_call.1} parent=1 // pred_check
      _
    $region11: #{tpu_custom_call.1} parent=1 // pred_check_branch
      %39 = sbr.rel (0) target = $region13
    $region12: #{tpu_custom_call.1} parent=1 // pred_region
      %s41 = ssub.s32 512, 512
      %42 = vsyncadd [#allocation6], %s41
      %s43 = sshll.u32 [#allocation7], 4
      %s44 = int_to_ptr.vmem [resolvable:$true] %s43
      %49 = dma.hbm_to_vmem [thread:$0]  %s2, 512, %s44, [#allocation6], 128, 128, 8
    $region13: #{tpu_custom_call.1} parent=1 // pred_fallthru
      _
    // Predicated region
    $region14: #{tpu_custom_call.1} parent=1 // pred_check
      _
    $region15: #{tpu_custom_call.1} parent=1 // pred_check_branch
      %51 = sbr.rel (0) target = $region17
    $region16: #{tpu_custom_call.1} parent=1 // pred_region
      %s53 = ssub.s32 1024, 1024
      %54 = vsyncadd [#allocation9], %s53
      %s55 = sshll.u32 [#allocation8], 4
      %s56 = int_to_ptr.vmem [resolvable:$true] %s55
      %61 = dma.hbm_to_vmem [thread:$0]  %s3, 1024, %s56, [#allocation9], 128, 128, 8
    $region17: #{tpu_custom_call.1} parent=1 // pred_fallthru
      _
    // Predicated region
    $region18: #{tpu_custom_call.1} parent=1 // pred_check
      _
    $region19: #{tpu_custom_call.1} parent=1 // pred_check_branch
      %63 = sbr.rel (0) target = $region21
    $region20: #{tpu_custom_call.1} parent=1 // pred_region
      _
    $region21: #{tpu_custom_call.1} parent=1 // pred_fallthru
      _
    // Predicated region
    $region22: #{tpu_custom_call.1} parent=1 // pred_check
      _
    $region23: #{tpu_custom_call.1} parent=1 // pred_check_branch
      %65 = sbr.rel (0) target = $region25
    $region24: #{tpu_custom_call.1} parent=1 // pred_region
      %66 = dma.done [#allocation3], 256
    $region25: #{tpu_custom_call.1} parent=1 // pred_fallthru
      _
    // Predicated region
    $region26: #{tpu_custom_call.1} parent=1 // pred_check
      _
    $region27: #{tpu_custom_call.1} parent=1 // pred_check_branch
      %68 = sbr.rel (0) target = $region29
    $region28: #{tpu_custom_call.1} parent=1 // pred_region
      %69 = dma.done [#allocation6], 512
    $region29: #{tpu_custom_call.1} parent=1 // pred_fallthru
      _
    // Predicated region
    $region30: #{tpu_custom_call.1} parent=1 // pred_check
      _
    $region31: #{tpu_custom_call.1} parent=1 // pred_check_branch
      %71 = sbr.rel (0) target = $region33
    $region32: #{tpu_custom_call.1} parent=1 // pred_region
      %72 = dma.done [#allocation6], 512
    $region33: #{tpu_custom_call.1} parent=1 // pred_fallthru
      _
    // Predicated region
    $region34: #{tpu_custom_call.1} parent=1 // pred_check
      _
    $region35: #{tpu_custom_call.1} parent=1 // pred_check_branch
      %74 = sbr.rel (0) target = $region37
    $region36: #{tpu_custom_call.1} parent=1 // pred_region
      %75 = dma.done [#allocation9], 1024
    $region37: #{tpu_custom_call.1} parent=1 // pred_fallthru
      _
    %v76 = vld [vmem:[#allocation2] sm:$0xff]
    %v77 = vld [vmem:[#allocation2 + $0x8] sm:$0xff]
    %v78 = vld [vmem:[%s4] sm:$0xff]
    %v79 = vld [vmem:[#allocation7] sm:$0xff]
    %v80 = vld [vmem:[#allocation7 + $0x8] sm:$0xff]
    %v81 = vld [vmem:[#allocation7 + $0x10] sm:$0xff]
    %v82 = vld [vmem:[#allocation7 + $0x18] sm:$0xff]
    %v83 = vlaneseq
    %v84 = vshrl.u32 %v83, 7
    %v85 = vsub.s32 0, %v84
    %v86 = vrot.slane %v78, %v85
    %vm87 = vcmask 261120
    %v89 = vsel %vm87, %v76, 0
    %v92 = vsel %vm87, %v77, 0
    %94 = vmatprep.subr.mxu0 0.0
    %95 = vmatpush1.msra.mxu0 %v79
    %96 = vmatprep.subr.mxu0 0.0
    %97 = vmatpush1.msra.mxu0 %v80
    %98 = vmatprep.subr.mxu0 0.0
    %99 = vmatpush1.msra.mxu0 %v81
    %100 = vmatprep.subr.mxu0 0.0
    %101 = vmatpush1.msra.mxu0 %v82
    %102 = vmatprep.subr.mxu0 0.0
    %103 = vmatpush1.msra.mxu0 0.0
    %104 = vmatprep.subr.mxu0 0.0
    %105 = vmatpush1.msra.mxu0 0.0
    %106 = vmatprep.subr.mxu0 0.0
    %107 = vmatpush1.msra.mxu0 0.0
    %108 = vmatprep.subr.mxu0 0.0
    %109 = vmatpush1.msra.mxu0 0.0
    %110 = vmatprep.subr.mxu0 0.0
    %111 = vmatpush1.msra.mxu0 0.0
    %112 = vmatprep.subr.mxu0 0.0
    %113 = vmatpush1.msra.mxu0 0.0
    %114 = vmatprep.subr.mxu0 0.0
    %115 = vmatpush1.msra.mxu0 0.0
    %116 = vmatprep.subr.mxu0 0.0
    %117 = vmatpush1.msra.mxu0 0.0
    %118 = vmatprep.subr.mxu0 0.0
    %119 = vmatpush1.msra.mxu0 0.0
    %120 = vmatprep.subr.mxu0 0.0
    %121 = vmatpush1.msra.mxu0 0.0
    %122 = vmatprep.subr.mxu0 0.0
    %123 = vmatpush1.msra.mxu0 0.0
    %124 = vmatprep.subr.mxu0 0.0
    %125 = vmatpush1.msra.mxu0 0.0
    %126 = vmatprep.subr.mxu0 0.0
    %127 = vmatpush1.msra.mxu0 0.0
    %128 = vmatprep.subr.mxu0 0.0
    %129 = vmatpush1.msra.mxu0 0.0
    %130 = vmatprep.subr.mxu0 0.0
    %131 = vmatpush1.msra.mxu0 0.0
    %132 = vmatprep.subr.mxu0 0.0
    %133 = vmatpush1.msra.mxu0 0.0
    %134 = vmatprep.subr.mxu0 0.0
    %135 = vmatpush1.msra.mxu0 0.0
    %136 = vmatprep.subr.mxu0 0.0
    %137 = vmatpush1.msra.mxu0 0.0
    %138 = vmatprep.subr.mxu0 0.0
    %139 = vmatpush1.msra.mxu0 0.0
    %140 = vmatprep.subr.mxu0 0.0
    %141 = vmatpush1.msra.mxu0 0.0
    %142 = vmatprep.subr.mxu0 0.0
    %143 = vmatpush1.msra.mxu0 0.0
    %144 = vmatprep.subr.mxu0 0.0
    %145 = vmatpush1.msra.mxu0 0.0
    %146 = vmatprep.subr.mxu0 0.0
    %147 = vmatpush1.msra.mxu0 0.0
    %148 = vmatprep.subr.mxu0 0.0
    %149 = vmatpush1.msra.mxu0 0.0
    %150 = vmatprep.subr.mxu0 0.0
    %151 = vmatpush1.msra.mxu0 0.0
    %152 = vmatprep.subr.mxu0 0.0
    %153 = vmatpush1.msra.mxu0 0.0
    %154 = vmatprep.subr.mxu0 0.0
    %155 = vmatpush1.msra.mxu0 0.0
    %156 = vmatprep.subr.mxu0 0.0
    %157 = vmatpush1.msra.mxu0 0.0
    %158 = vmatprep.mubr.f32.mxu0 0.0
    %159 = vmatmul.mubr.f32.gmra.mrb[0].mxu0 %v89
    %v160 = vpop.f32.mrb[0].mxu0
    %v161 = vadd.f32 %v86, %v160
    %v162 = vpop.f32.mrb[0].mxu0
    %163 = vmatprep.mubr.f32.mxu0 0.0
    %164 = vmatmul.mubr.f32.gmra.mrb[0].mxu0 %v92
    %v165 = vpop.f32.mrb[0].mxu0
    %v166 = vadd.f32 %v86, %v165
    %v167 = vpop.f32.mrb[0].mxu0
    %168 = vdwg.mxu0
    %v169 = vld [vmem:[#allocation5] sm:$0xff]
    %v170 = vld [vmem:[#allocation5 + $0x8] sm:$0xff]
    %v171 = vld [vmem:[#allocation5 + $0x10] sm:$0xff]
    %v172 = vld [vmem:[#allocation5 + $0x18] sm:$0xff]
    %177 = vrot.lane.b32.xlu0 %v169, 32
    %v178 = vpop.permute.xlu0 %177
    %179 = vrot.lane.b32.xlu0 %v170, 32
    %v180 = vpop.permute.xlu0 %179
    %181 = vrot.lane.b32.xlu0 %v171, 32
    %v182 = vpop.permute.xlu0 %181
    %183 = vrot.lane.b32.xlu0 %v172, 32
    %v184 = vpop.permute.xlu0 %183
    %v189 = vmul.f32 %v161, %v178
    %v190 = vmul.f32 %v161, %v180
    %v191 = vmul.f32 %v161, %v182
    %v192 = vmul.f32 %v161, %v184
    %v193 = vmul.f32 %v166, %v178
    %v194 = vmul.f32 %v166, %v180
    %v195 = vmul.f32 %v166, %v182
    %v196 = vmul.f32 %v166, %v184
    %197 = vrot.lane.b32.xlu0 %v169, 64
    %v198 = vpop.permute.xlu0 %197
    %199 = vrot.lane.b32.xlu0 %v170, 64
    %v200 = vpop.permute.xlu0 %199
    %201 = vrot.lane.b32.xlu0 %v171, 64
    %v202 = vpop.permute.xlu0 %201
    %203 = vrot.lane.b32.xlu0 %v172, 64
    %v204 = vpop.permute.xlu0 %203
    %v209 = vmul.f32 %v161, %v198
    %v210 = vmul.f32 %v161, %v200
    %v211 = vmul.f32 %v161, %v202
    %v212 = vmul.f32 %v161, %v204
    %v213 = vmul.f32 %v166, %v198
    %v214 = vmul.f32 %v166, %v200
    %v215 = vmul.f32 %v166, %v202
    %v216 = vmul.f32 %v166, %v204
    %218 = vrot.lane.b32.xlu0 %v189, 96
    %v219 = vpop.permute.xlu0 %218
    %v221 = vsel %vm87, %v161, 0
    %v223 = vsel %vm87, %v219, 0
    %225 = vmatprep.subr.mxu0 0.0
    %226 = vmatpush1.xpose.msra.mxu0 %v223
    %227 = vmatprep.subr.mxu0 0.0
    %228 = vmatpush1.xpose.msra.mxu0 0.0
    %229 = vmatprep.subr.mxu0 0.0
    %230 = vmatpush1.xpose.msra.mxu0 0.0
    %231 = vmatprep.subr.mxu0 0.0
    %232 = vmatpush1.xpose.msra.mxu0 0.0
    %233 = vmatprep.subr.mxu0 0.0
    %234 = vmatpush1.xpose.msra.mxu0 0.0
    %235 = vmatprep.subr.mxu0 0.0
    %236 = vmatpush1.xpose.msra.mxu0 0.0
    %237 = vmatprep.subr.mxu0 0.0
    %238 = vmatpush1.xpose.msra.mxu0 0.0
    %239 = vmatprep.subr.mxu0 0.0
    %240 = vmatpush1.xpose.msra.mxu0 0.0
    %241 = vmatprep.subr.mxu0 0.0
    %242 = vmatpush1.xpose.msra.mxu0 0.0
    %243 = vmatprep.subr.mxu0 0.0
    %244 = vmatpush1.xpose.msra.mxu0 0.0
    %245 = vmatprep.subr.mxu0 0.0
    %246 = vmatpush1.xpose.msra.mxu0 0.0
    %247 = vmatprep.subr.mxu0 0.0
    %248 = vmatpush1.xpose.msra.mxu0 0.0
    %249 = vmatprep.subr.mxu0 0.0
    %250 = vmatpush1.xpose.msra.mxu0 0.0
    %251 = vmatprep.subr.mxu0 0.0
    %252 = vmatpush1.xpose.msra.mxu0 0.0
    %253 = vmatprep.subr.mxu0 0.0
    %254 = vmatpush1.xpose.msra.mxu0 0.0
    %255 = vmatprep.subr.mxu0 0.0
    %256 = vmatpush1.xpose.msra.mxu0 0.0
    %257 = vmatprep.subr.mxu0 0.0
    %258 = vmatpush1.xpose.msra.mxu0 0.0
    %259 = vmatprep.subr.mxu0 0.0
    %260 = vmatpush1.xpose.msra.mxu0 0.0
    %261 = vmatprep.subr.mxu0 0.0
    %262 = vmatpush1.xpose.msra.mxu0 0.0
    %263 = vmatprep.subr.mxu0 0.0
    %264 = vmatpush1.xpose.msra.mxu0 0.0
    %265 = vmatprep.subr.mxu0 0.0
    %266 = vmatpush1.xpose.msra.mxu0 0.0
    %267 = vmatprep.subr.mxu0 0.0
    %268 = vmatpush1.xpose.msra.mxu0 0.0
    %269 = vmatprep.subr.mxu0 0.0
    %270 = vmatpush1.xpose.msra.mxu0 0.0
    %271 = vmatprep.subr.mxu0 0.0
    %272 = vmatpush1.xpose.msra.mxu0 0.0
    %273 = vmatprep.subr.mxu0 0.0
    %274 = vmatpush1.xpose.msra.mxu0 0.0
    %275 = vmatprep.subr.mxu0 0.0
    %276 = vmatpush1.xpose.msra.mxu0 0.0
    %277 = vmatprep.subr.mxu0 0.0
    %278 = vmatpush1.xpose.msra.mxu0 0.0
    %279 = vmatprep.subr.mxu0 0.0
    %280 = vmatpush1.xpose.msra.mxu0 0.0
    %281 = vmatprep.subr.mxu0 0.0
    %282 = vmatpush1.xpose.msra.mxu0 0.0
    %283 = vmatprep.subr.mxu0 0.0
    %284 = vmatpush1.xpose.msra.mxu0 0.0
    %285 = vmatprep.subr.mxu0 0.0
    %286 = vmatpush1.xpose.msra.mxu0 0.0
    %287 = vmatprep.subr.mxu0 0.0
    %288 = vmatpush1.xpose.msra.mxu0 0.0
    %289 = vmatprep.mubr.f32.mxu0 0.0
    %290 = vmatmul.mubr.f32.gmra.mrb[0].mxu0 %v221
    %v291 = vpop.f32.mrb[0].mxu0
    %v292 = vadd.f32 0.0, %v291
    %v293 = vpop.f32.mrb[0].mxu0
    %294 = vdwg.mxu0
    %296 = vrot.lane.b32.xlu0 %v190, 96
    %v297 = vpop.permute.xlu0 %296
    %v298 = vsel %vm87, %v297, 0
    %300 = vmatprep.subr.mxu0 0.0
    %301 = vmatpush1.xpose.msra.mxu0 %v298
    %302 = vmatprep.subr.mxu0 0.0
    %303 = vmatpush1.xpose.msra.mxu0 0.0
    %304 = vmatprep.subr.mxu0 0.0
    %305 = vmatpush1.xpose.msra.mxu0 0.0
    %306 = vmatprep.subr.mxu0 0.0
    %307 = vmatpush1.xpose.msra.mxu0 0.0
    %308 = vmatprep.subr.mxu0 0.0
    %309 = vmatpush1.xpose.msra.mxu0 0.0
    %310 = vmatprep.subr.mxu0 0.0
    %311 = vmatpush1.xpose.msra.mxu0 0.0
    %312 = vmatprep.subr.mxu0 0.0
    %313 = vmatpush1.xpose.msra.mxu0 0.0
    %314 = vmatprep.subr.mxu0 0.0
    %315 = vmatpush1.xpose.msra.mxu0 0.0
    %316 = vmatprep.subr.mxu0 0.0
    %317 = vmatpush1.xpose.msra.mxu0 0.0
    %318 = vmatprep.subr.mxu0 0.0
    %319 = vmatpush1.xpose.msra.mxu0 0.0
    %320 = vmatprep.subr.mxu0 0.0
    %321 = vmatpush1.xpose.msra.mxu0 0.0
    %322 = vmatprep.subr.mxu0 0.0
    %323 = vmatpush1.xpose.msra.mxu0 0.0
    %324 = vmatprep.subr.mxu0 0.0
    %325 = vmatpush1.xpose.msra.mxu0 0.0
    %326 = vmatprep.subr.mxu0 0.0
    %327 = vmatpush1.xpose.msra.mxu0 0.0
    %328 = vmatprep.subr.mxu0 0.0
    %329 = vmatpush1.xpose.msra.mxu0 0.0
    %330 = vmatprep.subr.mxu0 0.0
    %331 = vmatpush1.xpose.msra.mxu0 0.0
    %332 = vmatprep.subr.mxu0 0.0
    %333 = vmatpush1.xpose.msra.mxu0 0.0
    %334 = vmatprep.subr.mxu0 0.0
    %335 = vmatpush1.xpose.msra.mxu0 0.0
    %336 = vmatprep.subr.mxu0 0.0
    %337 = vmatpush1.xpose.msra.mxu0 0.0
    %338 = vmatprep.subr.mxu0 0.0
    %339 = vmatpush1.xpose.msra.mxu0 0.0
    %340 = vmatprep.subr.mxu0 0.0
    %341 = vmatpush1.xpose.msra.mxu0 0.0
    %342 = vmatprep.subr.mxu0 0.0
    %343 = vmatpush1.xpose.msra.mxu0 0.0
    %344 = vmatprep.subr.mxu0 0.0
    %345 = vmatpush1.xpose.msra.mxu0 0.0
    %346 = vmatprep.subr.mxu0 0.0
    %347 = vmatpush1.xpose.msra.mxu0 0.0
    %348 = vmatprep.subr.mxu0 0.0
    %349 = vmatpush1.xpose.msra.mxu0 0.0
    %350 = vmatprep.subr.mxu0 0.0
    %351 = vmatpush1.xpose.msra.mxu0 0.0
    %352 = vmatprep.subr.mxu0 0.0
    %353 = vmatpush1.xpose.msra.mxu0 0.0
    %354 = vmatprep.subr.mxu0 0.0
    %355 = vmatpush1.xpose.msra.mxu0 0.0
    %356 = vmatprep.subr.mxu0 0.0
    %357 = vmatpush1.xpose.msra.mxu0 0.0
    %358 = vmatprep.subr.mxu0 0.0
    %359 = vmatpush1.xpose.msra.mxu0 0.0
    %360 = vmatprep.subr.mxu0 0.0
    %361 = vmatpush1.xpose.msra.mxu0 0.0
    %362 = vmatprep.subr.mxu0 0.0
    %363 = vmatpush1.xpose.msra.mxu0 0.0
    %364 = vmatprep.mubr.f32.mxu0 0.0
    %365 = vmatmul.mubr.f32.gmra.mrb[0].mxu0 %v221
    %v366 = vpop.f32.mrb[0].mxu0
    %v367 = vadd.f32 0.0, %v366
    %v368 = vpop.f32.mrb[0].mxu0
    %369 = vdwg.mxu0
    %371 = vrot.lane.b32.xlu0 %v191, 96
    %v372 = vpop.permute.xlu0 %371
    %v373 = vsel %vm87, %v372, 0
    %375 = vmatprep.subr.mxu0 0.0
    %376 = vmatpush1.xpose.msra.mxu0 %v373
    %377 = vmatprep.subr.mxu0 0.0
    %378 = vmatpush1.xpose.msra.mxu0 0.0
    %379 = vmatprep.subr.mxu0 0.0
    %380 = vmatpush1.xpose.msra.mxu0 0.0
    %381 = vmatprep.subr.mxu0 0.0
    %382 = vmatpush1.xpose.msra.mxu0 0.0
    %383 = vmatprep.subr.mxu0 0.0
    %384 = vmatpush1.xpose.msra.mxu0 0.0
    %385 = vmatprep.subr.mxu0 0.0
    %386 = vmatpush1.xpose.msra.mxu0 0.0
    %387 = vmatprep.subr.mxu0 0.0
    %388 = vmatpush1.xpose.msra.mxu0 0.0
    %389 = vmatprep.subr.mxu0 0.0
    %390 = vmatpush1.xpose.msra.mxu0 0.0
    %391 = vmatprep.subr.mxu0 0.0
    %392 = vmatpush1.xpose.msra.mxu0 0.0
    %393 = vmatprep.subr.mxu0 0.0
    %394 = vmatpush1.xpose.msra.mxu0 0.0
    %395 = vmatprep.subr.mxu0 0.0
    %396 = vmatpush1.xpose.msra.mxu0 0.0
    %397 = vmatprep.subr.mxu0 0.0
    %398 = vmatpush1.xpose.msra.mxu0 0.0
    %399 = vmatprep.subr.mxu0 0.0
    %400 = vmatpush1.xpose.msra.mxu0 0.0
    %401 = vmatprep.subr.mxu0 0.0
    %402 = vmatpush1.xpose.msra.mxu0 0.0
    %403 = vmatprep.subr.mxu0 0.0
    %404 = vmatpush1.xpose.msra.mxu0 0.0
    %405 = vmatprep.subr.mxu0 0.0
    %406 = vmatpush1.xpose.msra.mxu0 0.0
    %407 = vmatprep.subr.mxu0 0.0
    %408 = vmatpush1.xpose.msra.mxu0 0.0
    %409 = vmatprep.subr.mxu0 0.0
    %410 = vmatpush1.xpose.msra.mxu0 0.0
    %411 = vmatprep.subr.mxu0 0.0
    %412 = vmatpush1.xpose.msra.mxu0 0.0
    %413 = vmatprep.subr.mxu0 0.0
    %414 = vmatpush1.xpose.msra.mxu0 0.0
    %415 = vmatprep.subr.mxu0 0.0
    %416 = vmatpush1.xpose.msra.mxu0 0.0
    %417 = vmatprep.subr.mxu0 0.0
    %418 = vmatpush1.xpose.msra.mxu0 0.0
    %419 = vmatprep.subr.mxu0 0.0
    %420 = vmatpush1.xpose.msra.mxu0 0.0
    %421 = vmatprep.subr.mxu0 0.0
    %422 = vmatpush1.xpose.msra.mxu0 0.0
    %423 = vmatprep.subr.mxu0 0.0
    %424 = vmatpush1.xpose.msra.mxu0 0.0
    %425 = vmatprep.subr.mxu0 0.0
    %426 = vmatpush1.xpose.msra.mxu0 0.0
    %427 = vmatprep.subr.mxu0 0.0
    %428 = vmatpush1.xpose.msra.mxu0 0.0
    %429 = vmatprep.subr.mxu0 0.0
    %430 = vmatpush1.xpose.msra.mxu0 0.0
    %431 = vmatprep.subr.mxu0 0.0
    %432 = vmatpush1.xpose.msra.mxu0 0.0
    %433 = vmatprep.subr.mxu0 0.0
    %434 = vmatpush1.xpose.msra.mxu0 0.0
    %435 = vmatprep.subr.mxu0 0.0
    %436 = vmatpush1.xpose.msra.mxu0 0.0
    %437 = vmatprep.subr.mxu0 0.0
    %438 = vmatpush1.xpose.msra.mxu0 0.0
    %439 = vmatprep.mubr.f32.mxu0 0.0
    %440 = vmatmul.mubr.f32.gmra.mrb[0].mxu0 %v221
    %v441 = vpop.f32.mrb[0].mxu0
    %v442 = vadd.f32 0.0, %v441
    %v443 = vpop.f32.mrb[0].mxu0
    %444 = vdwg.mxu0
    %446 = vrot.lane.b32.xlu0 %v192, 96
    %v447 = vpop.permute.xlu0 %446
    %v448 = vsel %vm87, %v447, 0
    %450 = vmatprep.subr.mxu0 0.0
    %451 = vmatpush1.xpose.msra.mxu0 %v448
    %452 = vmatprep.subr.mxu0 0.0
    %453 = vmatpush1.xpose.msra.mxu0 0.0
    %454 = vmatprep.subr.mxu0 0.0
    %455 = vmatpush1.xpose.msra.mxu0 0.0
    %456 = vmatprep.subr.mxu0 0.0
    %457 = vmatpush1.xpose.msra.mxu0 0.0
    %458 = vmatprep.subr.mxu0 0.0
    %459 = vmatpush1.xpose.msra.mxu0 0.0
    %460 = vmatprep.subr.mxu0 0.0
    %461 = vmatpush1.xpose.msra.mxu0 0.0
    %462 = vmatprep.subr.mxu0 0.0
    %463 = vmatpush1.xpose.msra.mxu0 0.0
    %464 = vmatprep.subr.mxu0 0.0
    %465 = vmatpush1.xpose.msra.mxu0 0.0
    %466 = vmatprep.subr.mxu0 0.0
    %467 = vmatpush1.xpose.msra.mxu0 0.0
    %468 = vmatprep.subr.mxu0 0.0
    %469 = vmatpush1.xpose.msra.mxu0 0.0
    %470 = vmatprep.subr.mxu0 0.0
    %471 = vmatpush1.xpose.msra.mxu0 0.0
    %472 = vmatprep.subr.mxu0 0.0
    %473 = vmatpush1.xpose.msra.mxu0 0.0
    %474 = vmatprep.subr.mxu0 0.0
    %475 = vmatpush1.xpose.msra.mxu0 0.0
    %476 = vmatprep.subr.mxu0 0.0
    %477 = vmatpush1.xpose.msra.mxu0 0.0
    %478 = vmatprep.subr.mxu0 0.0
    %479 = vmatpush1.xpose.msra.mxu0 0.0
    %480 = vmatprep.subr.mxu0 0.0
    %481 = vmatpush1.xpose.msra.mxu0 0.0
    %482 = vmatprep.subr.mxu0 0.0
    %483 = vmatpush1.xpose.msra.mxu0 0.0
    %484 = vmatprep.subr.mxu0 0.0
    %485 = vmatpush1.xpose.msra.mxu0 0.0
    %486 = vmatprep.subr.mxu0 0.0
    %487 = vmatpush1.xpose.msra.mxu0 0.0
    %488 = vmatprep.subr.mxu0 0.0
    %489 = vmatpush1.xpose.msra.mxu0 0.0
    %490 = vmatprep.subr.mxu0 0.0
    %491 = vmatpush1.xpose.msra.mxu0 0.0
    %492 = vmatprep.subr.mxu0 0.0
    %493 = vmatpush1.xpose.msra.mxu0 0.0
    %494 = vmatprep.subr.mxu0 0.0
    %495 = vmatpush1.xpose.msra.mxu0 0.0
    %496 = vmatprep.subr.mxu0 0.0
    %497 = vmatpush1.xpose.msra.mxu0 0.0
    %498 = vmatprep.subr.mxu0 0.0
    %499 = vmatpush1.xpose.msra.mxu0 0.0
    %500 = vmatprep.subr.mxu0 0.0
    %501 = vmatpush1.xpose.msra.mxu0 0.0
    %502 = vmatprep.subr.mxu0 0.0
    %503 = vmatpush1.xpose.msra.mxu0 0.0
    %504 = vmatprep.subr.mxu0 0.0
    %505 = vmatpush1.xpose.msra.mxu0 0.0
    %506 = vmatprep.subr.mxu0 0.0
    %507 = vmatpush1.xpose.msra.mxu0 0.0
    %508 = vmatprep.subr.mxu0 0.0
    %509 = vmatpush1.xpose.msra.mxu0 0.0
    %510 = vmatprep.subr.mxu0 0.0
    %511 = vmatpush1.xpose.msra.mxu0 0.0
    %512 = vmatprep.subr.mxu0 0.0
    %513 = vmatpush1.xpose.msra.mxu0 0.0
    %514 = vmatprep.mubr.f32.mxu0 0.0
    %515 = vmatmul.mubr.f32.gmra.mrb[0].mxu0 %v221
    %v516 = vpop.f32.mrb[0].mxu0
    %v517 = vadd.f32 0.0, %v516
    %v518 = vpop.f32.mrb[0].mxu0
    %519 = vdwg.mxu0
    %521 = vrot.lane.b32.xlu0 %v193, 96
    %v522 = vpop.permute.xlu0 %521
    %v524 = vsel %vm87, %v166, 0
    %v526 = vsel %vm87, %v522, 0
    %528 = vmatprep.subr.mxu0 0.0
    %529 = vmatpush1.xpose.msra.mxu0 %v526
    %530 = vmatprep.subr.mxu0 0.0
    %531 = vmatpush1.xpose.msra.mxu0 0.0
    %532 = vmatprep.subr.mxu0 0.0
    %533 = vmatpush1.xpose.msra.mxu0 0.0
    %534 = vmatprep.subr.mxu0 0.0
    %535 = vmatpush1.xpose.msra.mxu0 0.0
    %536 = vmatprep.subr.mxu0 0.0
    %537 = vmatpush1.xpose.msra.mxu0 0.0
    %538 = vmatprep.subr.mxu0 0.0
    %539 = vmatpush1.xpose.msra.mxu0 0.0
    %540 = vmatprep.subr.mxu0 0.0
    %541 = vmatpush1.xpose.msra.mxu0 0.0
    %542 = vmatprep.subr.mxu0 0.0
    %543 = vmatpush1.xpose.msra.mxu0 0.0
    %544 = vmatprep.subr.mxu0 0.0
    %545 = vmatpush1.xpose.msra.mxu0 0.0
    %546 = vmatprep.subr.mxu0 0.0
    %547 = vmatpush1.xpose.msra.mxu0 0.0
    %548 = vmatprep.subr.mxu0 0.0
    %549 = vmatpush1.xpose.msra.mxu0 0.0
    %550 = vmatprep.subr.mxu0 0.0
    %551 = vmatpush1.xpose.msra.mxu0 0.0
    %552 = vmatprep.subr.mxu0 0.0
    %553 = vmatpush1.xpose.msra.mxu0 0.0
    %554 = vmatprep.subr.mxu0 0.0
    %555 = vmatpush1.xpose.msra.mxu0 0.0
    %556 = vmatprep.subr.mxu0 0.0
    %557 = vmatpush1.xpose.msra.mxu0 0.0
    %558 = vmatprep.subr.mxu0 0.0
    %559 = vmatpush1.xpose.msra.mxu0 0.0
    %560 = vmatprep.subr.mxu0 0.0
    %561 = vmatpush1.xpose.msra.mxu0 0.0
    %562 = vmatprep.subr.mxu0 0.0
    %563 = vmatpush1.xpose.msra.mxu0 0.0
    %564 = vmatprep.subr.mxu0 0.0
    %565 = vmatpush1.xpose.msra.mxu0 0.0
    %566 = vmatprep.subr.mxu0 0.0
    %567 = vmatpush1.xpose.msra.mxu0 0.0
    %568 = vmatprep.subr.mxu0 0.0
    %569 = vmatpush1.xpose.msra.mxu0 0.0
    %570 = vmatprep.subr.mxu0 0.0
    %571 = vmatpush1.xpose.msra.mxu0 0.0
    %572 = vmatprep.subr.mxu0 0.0
    %573 = vmatpush1.xpose.msra.mxu0 0.0
    %574 = vmatprep.subr.mxu0 0.0
    %575 = vmatpush1.xpose.msra.mxu0 0.0
    %576 = vmatprep.subr.mxu0 0.0
    %577 = vmatpush1.xpose.msra.mxu0 0.0
    %578 = vmatprep.subr.mxu0 0.0
    %579 = vmatpush1.xpose.msra.mxu0 0.0
    %580 = vmatprep.subr.mxu0 0.0
    %581 = vmatpush1.xpose.msra.mxu0 0.0
    %582 = vmatprep.subr.mxu0 0.0
    %583 = vmatpush1.xpose.msra.mxu0 0.0
    %584 = vmatprep.subr.mxu0 0.0
    %585 = vmatpush1.xpose.msra.mxu0 0.0
    %586 = vmatprep.subr.mxu0 0.0
    %587 = vmatpush1.xpose.msra.mxu0 0.0
    %588 = vmatprep.subr.mxu0 0.0
    %589 = vmatpush1.xpose.msra.mxu0 0.0
    %590 = vmatprep.subr.mxu0 0.0
    %591 = vmatpush1.xpose.msra.mxu0 0.0
    %592 = vmatprep.mubr.f32.mxu0 0.0
    %593 = vmatmul.mubr.f32.gmra.mrb[0].mxu0 %v524
    %v594 = vpop.f32.mrb[0].mxu0
    %v595 = vadd.f32 0.0, %v594
    %v596 = vpop.f32.mrb[0].mxu0
    %597 = vdwg.mxu0
    %599 = vrot.lane.b32.xlu0 %v194, 96
    %v600 = vpop.permute.xlu0 %599
    %v601 = vsel %vm87, %v600, 0
    %603 = vmatprep.subr.mxu0 0.0
    %604 = vmatpush1.xpose.msra.mxu0 %v601
    %605 = vmatprep.subr.mxu0 0.0
    %606 = vmatpush1.xpose.msra.mxu0 0.0
    %607 = vmatprep.subr.mxu0 0.0
    %608 = vmatpush1.xpose.msra.mxu0 0.0
    %609 = vmatprep.subr.mxu0 0.0
    %610 = vmatpush1.xpose.msra.mxu0 0.0
    %611 = vmatprep.subr.mxu0 0.0
    %612 = vmatpush1.xpose.msra.mxu0 0.0
    %613 = vmatprep.subr.mxu0 0.0
    %614 = vmatpush1.xpose.msra.mxu0 0.0
    %615 = vmatprep.subr.mxu0 0.0
    %616 = vmatpush1.xpose.msra.mxu0 0.0
    %617 = vmatprep.subr.mxu0 0.0
    %618 = vmatpush1.xpose.msra.mxu0 0.0
    %619 = vmatprep.subr.mxu0 0.0
    %620 = vmatpush1.xpose.msra.mxu0 0.0
    %621 = vmatprep.subr.mxu0 0.0
    %622 = vmatpush1.xpose.msra.mxu0 0.0
    %623 = vmatprep.subr.mxu0 0.0
    %624 = vmatpush1.xpose.msra.mxu0 0.0
    %625 = vmatprep.subr.mxu0 0.0
    %626 = vmatpush1.xpose.msra.mxu0 0.0
    %627 = vmatprep.subr.mxu0 0.0
    %628 = vmatpush1.xpose.msra.mxu0 0.0
    %629 = vmatprep.subr.mxu0 0.0
    %630 = vmatpush1.xpose.msra.mxu0 0.0
    %631 = vmatprep.subr.mxu0 0.0
    %632 = vmatpush1.xpose.msra.mxu0 0.0
    %633 = vmatprep.subr.mxu0 0.0
    %634 = vmatpush1.xpose.msra.mxu0 0.0
    %635 = vmatprep.subr.mxu0 0.0
    %636 = vmatpush1.xpose.msra.mxu0 0.0
    %637 = vmatprep.subr.mxu0 0.0
    %638 = vmatpush1.xpose.msra.mxu0 0.0
    %639 = vmatprep.subr.mxu0 0.0
    %640 = vmatpush1.xpose.msra.mxu0 0.0
    %641 = vmatprep.subr.mxu0 0.0
    %642 = vmatpush1.xpose.msra.mxu0 0.0
    %643 = vmatprep.subr.mxu0 0.0
    %644 = vmatpush1.xpose.msra.mxu0 0.0
    %645 = vmatprep.subr.mxu0 0.0
    %646 = vmatpush1.xpose.msra.mxu0 0.0
    %647 = vmatprep.subr.mxu0 0.0
    %648 = vmatpush1.xpose.msra.mxu0 0.0
    %649 = vmatprep.subr.mxu0 0.0
    %650 = vmatpush1.xpose.msra.mxu0 0.0
    %651 = vmatprep.subr.mxu0 0.0
    %652 = vmatpush1.xpose.msra.mxu0 0.0
    %653 = vmatprep.subr.mxu0 0.0
    %654 = vmatpush1.xpose.msra.mxu0 0.0
    %655 = vmatprep.subr.mxu0 0.0
    %656 = vmatpush1.xpose.msra.mxu0 0.0
    %657 = vmatprep.subr.mxu0 0.0
    %658 = vmatpush1.xpose.msra.mxu0 0.0
    %659 = vmatprep.subr.mxu0 0.0
    %660 = vmatpush1.xpose.msra.mxu0 0.0
    %661 = vmatprep.subr.mxu0 0.0
    %662 = vmatpush1.xpose.msra.mxu0 0.0
    %663 = vmatprep.subr.mxu0 0.0
    %664 = vmatpush1.xpose.msra.mxu0 0.0
    %665 = vmatprep.subr.mxu0 0.0
    %666 = vmatpush1.xpose.msra.mxu0 0.0
    %667 = vmatprep.mubr.f32.mxu0 0.0
    %668 = vmatmul.mubr.f32.gmra.mrb[0].mxu0 %v524
    %v669 = vpop.f32.mrb[0].mxu0
    %v670 = vadd.f32 0.0, %v669
    %v671 = vpop.f32.mrb[0].mxu0
    %672 = vdwg.mxu0
    %674 = vrot.lane.b32.xlu0 %v195, 96
    %v675 = vpop.permute.xlu0 %674
    %v676 = vsel %vm87, %v675, 0
    %678 = vmatprep.subr.mxu0 0.0
    %679 = vmatpush1.xpose.msra.mxu0 %v676
    %680 = vmatprep.subr.mxu0 0.0
    %681 = vmatpush1.xpose.msra.mxu0 0.0
    %682 = vmatprep.subr.mxu0 0.0
    %683 = vmatpush1.xpose.msra.mxu0 0.0
    %684 = vmatprep.subr.mxu0 0.0
    %685 = vmatpush1.xpose.msra.mxu0 0.0
    %686 = vmatprep.subr.mxu0 0.0
    %687 = vmatpush1.xpose.msra.mxu0 0.0
    %688 = vmatprep.subr.mxu0 0.0
    %689 = vmatpush1.xpose.msra.mxu0 0.0
    %690 = vmatprep.subr.mxu0 0.0
    %691 = vmatpush1.xpose.msra.mxu0 0.0
    %692 = vmatprep.subr.mxu0 0.0
    %693 = vmatpush1.xpose.msra.mxu0 0.0
    %694 = vmatprep.subr.mxu0 0.0
    %695 = vmatpush1.xpose.msra.mxu0 0.0
    %696 = vmatprep.subr.mxu0 0.0
    %697 = vmatpush1.xpose.msra.mxu0 0.0
    %698 = vmatprep.subr.mxu0 0.0
    %699 = vmatpush1.xpose.msra.mxu0 0.0
    %700 = vmatprep.subr.mxu0 0.0
    %701 = vmatpush1.xpose.msra.mxu0 0.0
    %702 = vmatprep.subr.mxu0 0.0
    %703 = vmatpush1.xpose.msra.mxu0 0.0
    %704 = vmatprep.subr.mxu0 0.0
    %705 = vmatpush1.xpose.msra.mxu0 0.0
    %706 = vmatprep.subr.mxu0 0.0
    %707 = vmatpush1.xpose.msra.mxu0 0.0
    %708 = vmatprep.subr.mxu0 0.0
    %709 = vmatpush1.xpose.msra.mxu0 0.0
    %710 = vmatprep.subr.mxu0 0.0
    %711 = vmatpush1.xpose.msra.mxu0 0.0
    %712 = vmatprep.subr.mxu0 0.0
    %713 = vmatpush1.xpose.msra.mxu0 0.0
    %714 = vmatprep.subr.mxu0 0.0
    %715 = vmatpush1.xpose.msra.mxu0 0.0
    %716 = vmatprep.subr.mxu0 0.0
    %717 = vmatpush1.xpose.msra.mxu0 0.0
    %718 = vmatprep.subr.mxu0 0.0
    %719 = vmatpush1.xpose.msra.mxu0 0.0
    %720 = vmatprep.subr.mxu0 0.0
    %721 = vmatpush1.xpose.msra.mxu0 0.0
    %722 = vmatprep.subr.mxu0 0.0
    %723 = vmatpush1.xpose.msra.mxu0 0.0
    %724 = vmatprep.subr.mxu0 0.0
    %725 = vmatpush1.xpose.msra.mxu0 0.0
    %726 = vmatprep.subr.mxu0 0.0
    %727 = vmatpush1.xpose.msra.mxu0 0.0
    %728 = vmatprep.subr.mxu0 0.0
    %729 = vmatpush1.xpose.msra.mxu0 0.0
    %730 = vmatprep.subr.mxu0 0.0
    %731 = vmatpush1.xpose.msra.mxu0 0.0
    %732 = vmatprep.subr.mxu0 0.0
    %733 = vmatpush1.xpose.msra.mxu0 0.0
    %734 = vmatprep.subr.mxu0 0.0
    %735 = vmatpush1.xpose.msra.mxu0 0.0
    %736 = vmatprep.subr.mxu0 0.0
    %737 = vmatpush1.xpose.msra.mxu0 0.0
    %738 = vmatprep.subr.mxu0 0.0
    %739 = vmatpush1.xpose.msra.mxu0 0.0
    %740 = vmatprep.subr.mxu0 0.0
    %741 = vmatpush1.xpose.msra.mxu0 0.0
    %742 = vmatprep.mubr.f32.mxu0 0.0
    %743 = vmatmul.mubr.f32.gmra.mrb[0].mxu0 %v524
    %v744 = vpop.f32.mrb[0].mxu0
    %v745 = vadd.f32 0.0, %v744
    %v746 = vpop.f32.mrb[0].mxu0
    %747 = vdwg.mxu0
    %749 = vrot.lane.b32.xlu0 %v196, 96
    %v750 = vpop.permute.xlu0 %749
    %v751 = vsel %vm87, %v750, 0
    %753 = vmatprep.subr.mxu0 0.0
    %754 = vmatpush1.xpose.msra.mxu0 %v751
    %755 = vmatprep.subr.mxu0 0.0
    %756 = vmatpush1.xpose.msra.mxu0 0.0
    %757 = vmatprep.subr.mxu0 0.0
    %758 = vmatpush1.xpose.msra.mxu0 0.0
    %759 = vmatprep.subr.mxu0 0.0
    %760 = vmatpush1.xpose.msra.mxu0 0.0
    %761 = vmatprep.subr.mxu0 0.0
    %762 = vmatpush1.xpose.msra.mxu0 0.0
    %763 = vmatprep.subr.mxu0 0.0
    %764 = vmatpush1.xpose.msra.mxu0 0.0
    %765 = vmatprep.subr.mxu0 0.0
    %766 = vmatpush1.xpose.msra.mxu0 0.0
    %767 = vmatprep.subr.mxu0 0.0
    %768 = vmatpush1.xpose.msra.mxu0 0.0
    %769 = vmatprep.subr.mxu0 0.0
    %770 = vmatpush1.xpose.msra.mxu0 0.0
    %771 = vmatprep.subr.mxu0 0.0
    %772 = vmatpush1.xpose.msra.mxu0 0.0
    %773 = vmatprep.subr.mxu0 0.0
    %774 = vmatpush1.xpose.msra.mxu0 0.0
    %775 = vmatprep.subr.mxu0 0.0
    %776 = vmatpush1.xpose.msra.mxu0 0.0
    %777 = vmatprep.subr.mxu0 0.0
    %778 = vmatpush1.xpose.msra.mxu0 0.0
    %779 = vmatprep.subr.mxu0 0.0
    %780 = vmatpush1.xpose.msra.mxu0 0.0
    %781 = vmatprep.subr.mxu0 0.0
    %782 = vmatpush1.xpose.msra.mxu0 0.0
    %783 = vmatprep.subr.mxu0 0.0
    %784 = vmatpush1.xpose.msra.mxu0 0.0
    %785 = vmatprep.subr.mxu0 0.0
    %786 = vmatpush1.xpose.msra.mxu0 0.0
    %787 = vmatprep.subr.mxu0 0.0
    %788 = vmatpush1.xpose.msra.mxu0 0.0
    %789 = vmatprep.subr.mxu0 0.0
    %790 = vmatpush1.xpose.msra.mxu0 0.0
    %791 = vmatprep.subr.mxu0 0.0
    %792 = vmatpush1.xpose.msra.mxu0 0.0
    %793 = vmatprep.subr.mxu0 0.0
    %794 = vmatpush1.xpose.msra.mxu0 0.0
    %795 = vmatprep.subr.mxu0 0.0
    %796 = vmatpush1.xpose.msra.mxu0 0.0
    %797 = vmatprep.subr.mxu0 0.0
    %798 = vmatpush1.xpose.msra.mxu0 0.0
    %799 = vmatprep.subr.mxu0 0.0
    %800 = vmatpush1.xpose.msra.mxu0 0.0
    %801 = vmatprep.subr.mxu0 0.0
    %802 = vmatpush1.xpose.msra.mxu0 0.0
    %803 = vmatprep.subr.mxu0 0.0
    %804 = vmatpush1.xpose.msra.mxu0 0.0
    %805 = vmatprep.subr.mxu0 0.0
    %806 = vmatpush1.xpose.msra.mxu0 0.0
    %807 = vmatprep.subr.mxu0 0.0
    %808 = vmatpush1.xpose.msra.mxu0 0.0
    %809 = vmatprep.subr.mxu0 0.0
    %810 = vmatpush1.xpose.msra.mxu0 0.0
    %811 = vmatprep.subr.mxu0 0.0
    %812 = vmatpush1.xpose.msra.mxu0 0.0
    %813 = vmatprep.subr.mxu0 0.0
    %814 = vmatpush1.xpose.msra.mxu0 0.0
    %815 = vmatprep.subr.mxu0 0.0
    %816 = vmatpush1.xpose.msra.mxu0 0.0
    %817 = vmatprep.mubr.f32.mxu0 0.0
    %818 = vmatmul.mubr.f32.gmra.mrb[0].mxu0 %v524
    %v819 = vpop.f32.mrb[0].mxu0
    %v820 = vadd.f32 0.0, %v819
    %v821 = vpop.f32.mrb[0].mxu0
    %822 = vdwg.mxu0
    %v823 = vmul.f32 %v292, 0.35355338
    %v824 = vmul.f32 %v367, 0.35355338
    %v825 = vmul.f32 %v442, 0.35355338
    %v826 = vmul.f32 %v517, 0.35355338
    %v827 = vmul.f32 %v595, 0.35355338
    %v828 = vmul.f32 %v670, 0.35355338
    %v829 = vmul.f32 %v745, 0.35355338
    %v830 = vmul.f32 %v820, 0.35355338
    %vm831 = vcmask 64512
    %v832 = vsel %vm831, %v823, -inf
    %833 = vmax.xlane.f32.xlu0 %v832
    %v834 = vpop.xlane.xlu0 %833
    %v835 = vsel %vm831, %v824, -inf
    %836 = vmax.xlane.f32.xlu0 %v835
    %v837 = vpop.xlane.xlu0 %836
    %v838 = vsel %vm831, %v825, -inf
    %839 = vmax.xlane.f32.xlu0 %v838
    %v840 = vpop.xlane.xlu0 %839
    %v841 = vsel %vm831, %v826, -inf
    %842 = vmax.xlane.f32.xlu0 %v841
    %v843 = vpop.xlane.xlu0 %842
    %v844 = vsel %vm831, %v827, -inf
    %845 = vmax.xlane.f32.xlu0 %v844
    %v846 = vpop.xlane.xlu0 %845
    %v847 = vsel %vm831, %v828, -inf
    %848 = vmax.xlane.f32.xlu0 %v847
    %v849 = vpop.xlane.xlu0 %848
    %v850 = vsel %vm831, %v829, -inf
    %851 = vmax.xlane.f32.xlu0 %v850
    %v852 = vpop.xlane.xlu0 %851
    %v853 = vsel %vm831, %v830, -inf
    %854 = vmax.xlane.f32.xlu0 %v853
    %v855 = vpop.xlane.xlu0 %854
    %v856 = vsub.f32 %v823, %v834
    %v857 = vsub.f32 %v824, %v837
    %v858 = vsub.f32 %v825, %v840
    %v859 = vsub.f32 %v826, %v843
    %v860 = vsub.f32 %v827, %v846
    %v861 = vsub.f32 %v828, %v849
    %v862 = vsub.f32 %v829, %v852
    %v863 = vsub.f32 %v830, %v855
    %v864 = vmul.f32 %v856, 1.442695
    %v865 = vpow.pop %v864
    %v866 = vmul.f32 %v857, 1.442695
    %v867 = vpow.pop %v866
    %v868 = vmul.f32 %v858, 1.442695
    %v869 = vpow.pop %v868
    %v870 = vmul.f32 %v859, 1.442695
    %v871 = vpow.pop %v870
    %v872 = vmul.f32 %v860, 1.442695
    %v873 = vpow.pop %v872
    %v874 = vmul.f32 %v861, 1.442695
    %v875 = vpow.pop %v874
    %v876 = vmul.f32 %v862, 1.442695
    %v877 = vpow.pop %v876
    %v878 = vmul.f32 %v863, 1.442695
    %v879 = vpow.pop %v878
    %v880 = vsel %vm831, %v865, 0.0
    %881 = vadd.xlane.f32.xlu0 %v880
    %v882 = vpop.xlane.xlu0 %881
    %v883 = vsel %vm831, %v867, 0.0
    %884 = vadd.xlane.f32.xlu0 %v883
    %v885 = vpop.xlane.xlu0 %884
    %v886 = vsel %vm831, %v869, 0.0
    %887 = vadd.xlane.f32.xlu0 %v886
    %v888 = vpop.xlane.xlu0 %887
    %v889 = vsel %vm831, %v871, 0.0
    %890 = vadd.xlane.f32.xlu0 %v889
    %v891 = vpop.xlane.xlu0 %890
    %v892 = vsel %vm831, %v873, 0.0
    %893 = vadd.xlane.f32.xlu0 %v892
    %v894 = vpop.xlane.xlu0 %893
    %v895 = vsel %vm831, %v875, 0.0
    %896 = vadd.xlane.f32.xlu0 %v895
    %v897 = vpop.xlane.xlu0 %896
    %v898 = vsel %vm831, %v877, 0.0
    %899 = vadd.xlane.f32.xlu0 %v898
    %v900 = vpop.xlane.xlu0 %899
    %v901 = vsel %vm831, %v879, 0.0
    %902 = vadd.xlane.f32.xlu0 %v901
    %v903 = vpop.xlane.xlu0 %902
    %v904 = vrcp.pop %v882
    %v905 = vmul.f32 %v865, %v904
    %v906 = vrcp.pop %v885
    %v907 = vmul.f32 %v867, %v906
    %v908 = vrcp.pop %v888
    %v909 = vmul.f32 %v869, %v908
    %v910 = vrcp.pop %v891
    %v911 = vmul.f32 %v871, %v910
    %v912 = vrcp.pop %v894
    %v913 = vmul.f32 %v873, %v912
    %v914 = vrcp.pop %v897
    %v915 = vmul.f32 %v875, %v914
    %v916 = vrcp.pop %v900
    %v917 = vmul.f32 %v877, %v916
    %v918 = vrcp.pop %v903
    %v919 = vmul.f32 %v879, %v918
    %921 = vrot.lane.b32.xlu0 %v209, 64
    %v922 = vpop.permute.xlu0 %921
    %v925 = vsel %vm831, %v905, 0
    %927 = vmatprep.subr.mxu0 0.0
    %928 = vmatpush1.msra.mxu0 %v922
    %929 = vmatprep.subr.mxu0 0.0
    %930 = vmatpush1.msra.mxu0 0.0
    %931 = vmatprep.subr.mxu0 0.0
    %932 = vmatpush1.msra.mxu0 0.0
    %933 = vmatprep.subr.mxu0 0.0
    %934 = vmatpush1.msra.mxu0 0.0
    %935 = vmatprep.subr.mxu0 0.0
    %936 = vmatpush1.msra.mxu0 0.0
    %937 = vmatprep.subr.mxu0 0.0
    %938 = vmatpush1.msra.mxu0 0.0
    %939 = vmatprep.subr.mxu0 0.0
    %940 = vmatpush1.msra.mxu0 0.0
    %941 = vmatprep.subr.mxu0 0.0
    %942 = vmatpush1.msra.mxu0 0.0
    %943 = vmatprep.subr.mxu0 0.0
    %944 = vmatpush1.msra.mxu0 0.0
    %945 = vmatprep.subr.mxu0 0.0
    %946 = vmatpush1.msra.mxu0 0.0
    %947 = vmatprep.subr.mxu0 0.0
    %948 = vmatpush1.msra.mxu0 0.0
    %949 = vmatprep.subr.mxu0 0.0
    %950 = vmatpush1.msra.mxu0 0.0
    %951 = vmatprep.subr.mxu0 0.0
    %952 = vmatpush1.msra.mxu0 0.0
    %953 = vmatprep.subr.mxu0 0.0
    %954 = vmatpush1.msra.mxu0 0.0
    %955 = vmatprep.subr.mxu0 0.0
    %956 = vmatpush1.msra.mxu0 0.0
    %957 = vmatprep.subr.mxu0 0.0
    %958 = vmatpush1.msra.mxu0 0.0
    %959 = vmatprep.subr.mxu0 0.0
    %960 = vmatpush1.msra.mxu0 0.0
    %961 = vmatprep.subr.mxu0 0.0
    %962 = vmatpush1.msra.mxu0 0.0
    %963 = vmatprep.subr.mxu0 0.0
    %964 = vmatpush1.msra.mxu0 0.0
    %965 = vmatprep.subr.mxu0 0.0
    %966 = vmatpush1.msra.mxu0 0.0
    %967 = vmatprep.subr.mxu0 0.0
    %968 = vmatpush1.msra.mxu0 0.0
    %969 = vmatprep.subr.mxu0 0.0
    %970 = vmatpush1.msra.mxu0 0.0
    %971 = vmatprep.subr.mxu0 0.0
    %972 = vmatpush1.msra.mxu0 0.0
    %973 = vmatprep.subr.mxu0 0.0
    %974 = vmatpush1.msra.mxu0 0.0
    %975 = vmatprep.subr.mxu0 0.0
    %976 = vmatpush1.msra.mxu0 0.0
    %977 = vmatprep.subr.mxu0 0.0
    %978 = vmatpush1.msra.mxu0 0.0
    %979 = vmatprep.subr.mxu0 0.0
    %980 = vmatpush1.msra.mxu0 0.0
    %981 = vmatprep.subr.mxu0 0.0
    %982 = vmatpush1.msra.mxu0 0.0
    %983 = vmatprep.subr.mxu0 0.0
    %984 = vmatpush1.msra.mxu0 0.0
    %985 = vmatprep.subr.mxu0 0.0
    %986 = vmatpush1.msra.mxu0 0.0
    %987 = vmatprep.subr.mxu0 0.0
    %988 = vmatpush1.msra.mxu0 0.0
    %989 = vmatprep.subr.mxu0 0.0
    %990 = vmatpush1.msra.mxu0 0.0
    %991 = vmatprep.mubr.f32.mxu0 0.0
    %992 = vmatmul.mubr.f32.gmra.mrb[0].mxu0 %v925
    %v993 = vpop.f32.mrb[0].mxu0
    %v994 = vadd.f32 0.0, %v993
    %v995 = vpop.f32.mrb[0].mxu0
    %996 = vdwg.mxu0
    %998 = vrot.lane.b32.xlu0 %v210, 64
    %v999 = vpop.permute.xlu0 %998
    %v1002 = vsel %vm831, %v907, 0
    %1004 = vmatprep.subr.mxu0 0.0
    %1005 = vmatpush1.msra.mxu0 %v999
    %1006 = vmatprep.subr.mxu0 0.0
    %1007 = vmatpush1.msra.mxu0 0.0
    %1008 = vmatprep.subr.mxu0 0.0
    %1009 = vmatpush1.msra.mxu0 0.0
    %1010 = vmatprep.subr.mxu0 0.0
    %1011 = vmatpush1.msra.mxu0 0.0
    %1012 = vmatprep.subr.mxu0 0.0
    %1013 = vmatpush1.msra.mxu0 0.0
    %1014 = vmatprep.subr.mxu0 0.0
    %1015 = vmatpush1.msra.mxu0 0.0
    %1016 = vmatprep.subr.mxu0 0.0
    %1017 = vmatpush1.msra.mxu0 0.0
    %1018 = vmatprep.subr.mxu0 0.0
    %1019 = vmatpush1.msra.mxu0 0.0
    %1020 = vmatprep.subr.mxu0 0.0
    %1021 = vmatpush1.msra.mxu0 0.0
    %1022 = vmatprep.subr.mxu0 0.0
    %1023 = vmatpush1.msra.mxu0 0.0
    %1024 = vmatprep.subr.mxu0 0.0
    %1025 = vmatpush1.msra.mxu0 0.0
    %1026 = vmatprep.subr.mxu0 0.0
    %1027 = vmatpush1.msra.mxu0 0.0
    %1028 = vmatprep.subr.mxu0 0.0
    %1029 = vmatpush1.msra.mxu0 0.0
    %1030 = vmatprep.subr.mxu0 0.0
    %1031 = vmatpush1.msra.mxu0 0.0
    %1032 = vmatprep.subr.mxu0 0.0
    %1033 = vmatpush1.msra.mxu0 0.0
    %1034 = vmatprep.subr.mxu0 0.0
    %1035 = vmatpush1.msra.mxu0 0.0
    %1036 = vmatprep.subr.mxu0 0.0
    %1037 = vmatpush1.msra.mxu0 0.0
    %1038 = vmatprep.subr.mxu0 0.0
    %1039 = vmatpush1.msra.mxu0 0.0
    %1040 = vmatprep.subr.mxu0 0.0
    %1041 = vmatpush1.msra.mxu0 0.0
    %1042 = vmatprep.subr.mxu0 0.0
    %1043 = vmatpush1.msra.mxu0 0.0
    %1044 = vmatprep.subr.mxu0 0.0
    %1045 = vmatpush1.msra.mxu0 0.0
    %1046 = vmatprep.subr.mxu0 0.0
    %1047 = vmatpush1.msra.mxu0 0.0
    %1048 = vmatprep.subr.mxu0 0.0
    %1049 = vmatpush1.msra.mxu0 0.0
    %1050 = vmatprep.subr.mxu0 0.0
    %1051 = vmatpush1.msra.mxu0 0.0
    %1052 = vmatprep.subr.mxu0 0.0
    %1053 = vmatpush1.msra.mxu0 0.0
    %1054 = vmatprep.subr.mxu0 0.0
    %1055 = vmatpush1.msra.mxu0 0.0
    %1056 = vmatprep.subr.mxu0 0.0
    %1057 = vmatpush1.msra.mxu0 0.0
    %1058 = vmatprep.subr.mxu0 0.0
    %1059 = vmatpush1.msra.mxu0 0.0
    %1060 = vmatprep.subr.mxu0 0.0
    %1061 = vmatpush1.msra.mxu0 0.0
    %1062 = vmatprep.subr.mxu0 0.0
    %1063 = vmatpush1.msra.mxu0 0.0
    %1064 = vmatprep.subr.mxu0 0.0
    %1065 = vmatpush1.msra.mxu0 0.0
    %1066 = vmatprep.subr.mxu0 0.0
    %1067 = vmatpush1.msra.mxu0 0.0
    %1068 = vmatprep.mubr.f32.mxu0 0.0
    %1069 = vmatmul.mubr.f32.gmra.mrb[0].mxu0 %v1002
    %v1070 = vpop.f32.mrb[0].mxu0
    %v1071 = vadd.f32 0.0, %v1070
    %v1072 = vpop.f32.mrb[0].mxu0
    %1073 = vdwg.mxu0
    %1075 = vrot.lane.b32.xlu0 %v211, 64
    %v1076 = vpop.permute.xlu0 %1075
    %v1079 = vsel %vm831, %v909, 0
    %1081 = vmatprep.subr.mxu0 0.0
    %1082 = vmatpush1.msra.mxu0 %v1076
    %1083 = vmatprep.subr.mxu0 0.0
    %1084 = vmatpush1.msra.mxu0 0.0
    %1085 = vmatprep.subr.mxu0 0.0
    %1086 = vmatpush1.msra.mxu0 0.0
    %1087 = vmatprep.subr.mxu0 0.0
    %1088 = vmatpush1.msra.mxu0 0.0
    %1089 = vmatprep.subr.mxu0 0.0
    %1090 = vmatpush1.msra.mxu0 0.0
    %1091 = vmatprep.subr.mxu0 0.0
    %1092 = vmatpush1.msra.mxu0 0.0
    %1093 = vmatprep.subr.mxu0 0.0
    %1094 = vmatpush1.msra.mxu0 0.0
    %1095 = vmatprep.subr.mxu0 0.0
    %1096 = vmatpush1.msra.mxu0 0.0
    %1097 = vmatprep.subr.mxu0 0.0
    %1098 = vmatpush1.msra.mxu0 0.0
    %1099 = vmatprep.subr.mxu0 0.0
    %1100 = vmatpush1.msra.mxu0 0.0
    %1101 = vmatprep.subr.mxu0 0.0
    %1102 = vmatpush1.msra.mxu0 0.0
    %1103 = vmatprep.subr.mxu0 0.0
    %1104 = vmatpush1.msra.mxu0 0.0
    %1105 = vmatprep.subr.mxu0 0.0
    %1106 = vmatpush1.msra.mxu0 0.0
    %1107 = vmatprep.subr.mxu0 0.0
    %1108 = vmatpush1.msra.mxu0 0.0
    %1109 = vmatprep.subr.mxu0 0.0
    %1110 = vmatpush1.msra.mxu0 0.0
    %1111 = vmatprep.subr.mxu0 0.0
    %1112 = vmatpush1.msra.mxu0 0.0
    %1113 = vmatprep.subr.mxu0 0.0
    %1114 = vmatpush1.msra.mxu0 0.0
    %1115 = vmatprep.subr.mxu0 0.0
    %1116 = vmatpush1.msra.mxu0 0.0
    %1117 = vmatprep.subr.mxu0 0.0
    %1118 = vmatpush1.msra.mxu0 0.0
    %1119 = vmatprep.subr.mxu0 0.0
    %1120 = vmatpush1.msra.mxu0 0.0
    %1121 = vmatprep.subr.mxu0 0.0
    %1122 = vmatpush1.msra.mxu0 0.0
    %1123 = vmatprep.subr.mxu0 0.0
    %1124 = vmatpush1.msra.mxu0 0.0
    %1125 = vmatprep.subr.mxu0 0.0
    %1126 = vmatpush1.msra.mxu0 0.0
    %1127 = vmatprep.subr.mxu0 0.0
    %1128 = vmatpush1.msra.mxu0 0.0
    %1129 = vmatprep.subr.mxu0 0.0
    %1130 = vmatpush1.msra.mxu0 0.0
    %1131 = vmatprep.subr.mxu0 0.0
    %1132 = vmatpush1.msra.mxu0 0.0
    %1133 = vmatprep.subr.mxu0 0.0
    %1134 = vmatpush1.msra.mxu0 0.0
    %1135 = vmatprep.subr.mxu0 0.0
    %1136 = vmatpush1.msra.mxu0 0.0
    %1137 = vmatprep.subr.mxu0 0.0
    %1138 = vmatpush1.msra.mxu0 0.0
    %1139 = vmatprep.subr.mxu0 0.0
    %1140 = vmatpush1.msra.mxu0 0.0
    %1141 = vmatprep.subr.mxu0 0.0
    %1142 = vmatpush1.msra.mxu0 0.0
    %1143 = vmatprep.subr.mxu0 0.0
    %1144 = vmatpush1.msra.mxu0 0.0
    %1145 = vmatprep.mubr.f32.mxu0 0.0
    %1146 = vmatmul.mubr.f32.gmra.mrb[0].mxu0 %v1079
    %v1147 = vpop.f32.mrb[0].mxu0
    %v1148 = vadd.f32 0.0, %v1147
    %v1149 = vpop.f32.mrb[0].mxu0
    %1150 = vdwg.mxu0
    %1152 = vrot.lane.b32.xlu0 %v212, 64
    %v1153 = vpop.permute.xlu0 %1152
    %v1156 = vsel %vm831, %v911, 0
    %1158 = vmatprep.subr.mxu0 0.0
    %1159 = vmatpush1.msra.mxu0 %v1153
    %1160 = vmatprep.subr.mxu0 0.0
    %1161 = vmatpush1.msra.mxu0 0.0
    %1162 = vmatprep.subr.mxu0 0.0
    %1163 = vmatpush1.msra.mxu0 0.0
    %1164 = vmatprep.subr.mxu0 0.0
    %1165 = vmatpush1.msra.mxu0 0.0
    %1166 = vmatprep.subr.mxu0 0.0
    %1167 = vmatpush1.msra.mxu0 0.0
    %1168 = vmatprep.subr.mxu0 0.0
    %1169 = vmatpush1.msra.mxu0 0.0
    %1170 = vmatprep.subr.mxu0 0.0
    %1171 = vmatpush1.msra.mxu0 0.0
    %1172 = vmatprep.subr.mxu0 0.0
    %1173 = vmatpush1.msra.mxu0 0.0
    %1174 = vmatprep.subr.mxu0 0.0
    %1175 = vmatpush1.msra.mxu0 0.0
    %1176 = vmatprep.subr.mxu0 0.0
    %1177 = vmatpush1.msra.mxu0 0.0
    %1178 = vmatprep.subr.mxu0 0.0
    %1179 = vmatpush1.msra.mxu0 0.0
    %1180 = vmatprep.subr.mxu0 0.0
    %1181 = vmatpush1.msra.mxu0 0.0
    %1182 = vmatprep.subr.mxu0 0.0
    %1183 = vmatpush1.msra.mxu0 0.0
    %1184 = vmatprep.subr.mxu0 0.0
    %1185 = vmatpush1.msra.mxu0 0.0
    %1186 = vmatprep.subr.mxu0 0.0
    %1187 = vmatpush1.msra.mxu0 0.0
    %1188 = vmatprep.subr.mxu0 0.0
    %1189 = vmatpush1.msra.mxu0 0.0
    %1190 = vmatprep.subr.mxu0 0.0
    %1191 = vmatpush1.msra.mxu0 0.0
    %1192 = vmatprep.subr.mxu0 0.0
    %1193 = vmatpush1.msra.mxu0 0.0
    %1194 = vmatprep.subr.mxu0 0.0
    %1195 = vmatpush1.msra.mxu0 0.0
    %1196 = vmatprep.subr.mxu0 0.0
    %1197 = vmatpush1.msra.mxu0 0.0
    %1198 = vmatprep.subr.mxu0 0.0
    %1199 = vmatpush1.msra.mxu0 0.0
    %1200 = vmatprep.subr.mxu0 0.0
    %1201 = vmatpush1.msra.mxu0 0.0
    %1202 = vmatprep.subr.mxu0 0.0
    %1203 = vmatpush1.msra.mxu0 0.0
    %1204 = vmatprep.subr.mxu0 0.0
    %1205 = vmatpush1.msra.mxu0 0.0
    %1206 = vmatprep.subr.mxu0 0.0
    %1207 = vmatpush1.msra.mxu0 0.0
    %1208 = vmatprep.subr.mxu0 0.0
    %1209 = vmatpush1.msra.mxu0 0.0
    %1210 = vmatprep.subr.mxu0 0.0
    %1211 = vmatpush1.msra.mxu0 0.0
    %1212 = vmatprep.subr.mxu0 0.0
    %1213 = vmatpush1.msra.mxu0 0.0
    %1214 = vmatprep.subr.mxu0 0.0
    %1215 = vmatpush1.msra.mxu0 0.0
    %1216 = vmatprep.subr.mxu0 0.0
    %1217 = vmatpush1.msra.mxu0 0.0
    %1218 = vmatprep.subr.mxu0 0.0
    %1219 = vmatpush1.msra.mxu0 0.0
    %1220 = vmatprep.subr.mxu0 0.0
    %1221 = vmatpush1.msra.mxu0 0.0
    %1222 = vmatprep.mubr.f32.mxu0 0.0
    %1223 = vmatmul.mubr.f32.gmra.mrb[0].mxu0 %v1156
    %v1224 = vpop.f32.mrb[0].mxu0
    %v1225 = vadd.f32 0.0, %v1224
    %v1226 = vpop.f32.mrb[0].mxu0
    %1227 = vdwg.mxu0
    %1229 = vrot.lane.b32.xlu0 %v213, 64
    %v1230 = vpop.permute.xlu0 %1229
    %v1233 = vsel %vm831, %v913, 0
    %1235 = vmatprep.subr.mxu0 0.0
    %1236 = vmatpush1.msra.mxu0 %v1230
    %1237 = vmatprep.subr.mxu0 0.0
    %1238 = vmatpush1.msra.mxu0 0.0
    %1239 = vmatprep.subr.mxu0 0.0
    %1240 = vmatpush1.msra.mxu0 0.0
    %1241 = vmatprep.subr.mxu0 0.0
    %1242 = vmatpush1.msra.mxu0 0.0
    %1243 = vmatprep.subr.mxu0 0.0
    %1244 = vmatpush1.msra.mxu0 0.0
    %1245 = vmatprep.subr.mxu0 0.0
    %1246 = vmatpush1.msra.mxu0 0.0
    %1247 = vmatprep.subr.mxu0 0.0
    %1248 = vmatpush1.msra.mxu0 0.0
    %1249 = vmatprep.subr.mxu0 0.0
    %1250 = vmatpush1.msra.mxu0 0.0
    %1251 = vmatprep.subr.mxu0 0.0
    %1252 = vmatpush1.msra.mxu0 0.0
    %1253 = vmatprep.subr.mxu0 0.0
    %1254 = vmatpush1.msra.mxu0 0.0
    %1255 = vmatprep.subr.mxu0 0.0
    %1256 = vmatpush1.msra.mxu0 0.0
    %1257 = vmatprep.subr.mxu0 0.0
    %1258 = vmatpush1.msra.mxu0 0.0
    %1259 = vmatprep.subr.mxu0 0.0
    %1260 = vmatpush1.msra.mxu0 0.0
    %1261 = vmatprep.subr.mxu0 0.0
    %1262 = vmatpush1.msra.mxu0 0.0
    %1263 = vmatprep.subr.mxu0 0.0
    %1264 = vmatpush1.msra.mxu0 0.0
    %1265 = vmatprep.subr.mxu0 0.0
    %1266 = vmatpush1.msra.mxu0 0.0
    %1267 = vmatprep.subr.mxu0 0.0
    %1268 = vmatpush1.msra.mxu0 0.0
    %1269 = vmatprep.subr.mxu0 0.0
    %1270 = vmatpush1.msra.mxu0 0.0
    %1271 = vmatprep.subr.mxu0 0.0
    %1272 = vmatpush1.msra.mxu0 0.0
    %1273 = vmatprep.subr.mxu0 0.0
    %1274 = vmatpush1.msra.mxu0 0.0
    %1275 = vmatprep.subr.mxu0 0.0
    %1276 = vmatpush1.msra.mxu0 0.0
    %1277 = vmatprep.subr.mxu0 0.0
    %1278 = vmatpush1.msra.mxu0 0.0
    %1279 = vmatprep.subr.mxu0 0.0
    %1280 = vmatpush1.msra.mxu0 0.0
    %1281 = vmatprep.subr.mxu0 0.0
    %1282 = vmatpush1.msra.mxu0 0.0
    %1283 = vmatprep.subr.mxu0 0.0
    %1284 = vmatpush1.msra.mxu0 0.0
    %1285 = vmatprep.subr.mxu0 0.0
    %1286 = vmatpush1.msra.mxu0 0.0
    %1287 = vmatprep.subr.mxu0 0.0
    %1288 = vmatpush1.msra.mxu0 0.0
    %1289 = vmatprep.subr.mxu0 0.0
    %1290 = vmatpush1.msra.mxu0 0.0
    %1291 = vmatprep.subr.mxu0 0.0
    %1292 = vmatpush1.msra.mxu0 0.0
    %1293 = vmatprep.subr.mxu0 0.0
    %1294 = vmatpush1.msra.mxu0 0.0
    %1295 = vmatprep.subr.mxu0 0.0
    %1296 = vmatpush1.msra.mxu0 0.0
    %1297 = vmatprep.subr.mxu0 0.0
    %1298 = vmatpush1.msra.mxu0 0.0
    %1299 = vmatprep.mubr.f32.mxu0 0.0
    %1300 = vmatmul.mubr.f32.gmra.mrb[0].mxu0 %v1233
    %v1301 = vpop.f32.mrb[0].mxu0
    %v1302 = vadd.f32 0.0, %v1301
    %v1303 = vpop.f32.mrb[0].mxu0
    %1304 = vdwg.mxu0
    %1306 = vrot.lane.b32.xlu0 %v214, 64
    %v1307 = vpop.permute.xlu0 %1306
    %v1310 = vsel %vm831, %v915, 0
    %1312 = vmatprep.subr.mxu0 0.0
    %1313 = vmatpush1.msra.mxu0 %v1307
    %1314 = vmatprep.subr.mxu0 0.0
    %1315 = vmatpush1.msra.mxu0 0.0
    %1316 = vmatprep.subr.mxu0 0.0
    %1317 = vmatpush1.msra.mxu0 0.0
    %1318 = vmatprep.subr.mxu0 0.0
    %1319 = vmatpush1.msra.mxu0 0.0
    %1320 = vmatprep.subr.mxu0 0.0
    %1321 = vmatpush1.msra.mxu0 0.0
    %1322 = vmatprep.subr.mxu0 0.0
    %1323 = vmatpush1.msra.mxu0 0.0
    %1324 = vmatprep.subr.mxu0 0.0
    %1325 = vmatpush1.msra.mxu0 0.0
    %1326 = vmatprep.subr.mxu0 0.0
    %1327 = vmatpush1.msra.mxu0 0.0
    %1328 = vmatprep.subr.mxu0 0.0
    %1329 = vmatpush1.msra.mxu0 0.0
    %1330 = vmatprep.subr.mxu0 0.0
    %1331 = vmatpush1.msra.mxu0 0.0
    %1332 = vmatprep.subr.mxu0 0.0
    %1333 = vmatpush1.msra.mxu0 0.0
    %1334 = vmatprep.subr.mxu0 0.0
    %1335 = vmatpush1.msra.mxu0 0.0
    %1336 = vmatprep.subr.mxu0 0.0
    %1337 = vmatpush1.msra.mxu0 0.0
    %1338 = vmatprep.subr.mxu0 0.0
    %1339 = vmatpush1.msra.mxu0 0.0
    %1340 = vmatprep.subr.mxu0 0.0
    %1341 = vmatpush1.msra.mxu0 0.0
    %1342 = vmatprep.subr.mxu0 0.0
    %1343 = vmatpush1.msra.mxu0 0.0
    %1344 = vmatprep.subr.mxu0 0.0
    %1345 = vmatpush1.msra.mxu0 0.0
    %1346 = vmatprep.subr.mxu0 0.0
    %1347 = vmatpush1.msra.mxu0 0.0
    %1348 = vmatprep.subr.mxu0 0.0
    %1349 = vmatpush1.msra.mxu0 0.0
    %1350 = vmatprep.subr.mxu0 0.0
    %1351 = vmatpush1.msra.mxu0 0.0
    %1352 = vmatprep.subr.mxu0 0.0
    %1353 = vmatpush1.msra.mxu0 0.0
    %1354 = vmatprep.subr.mxu0 0.0
    %1355 = vmatpush1.msra.mxu0 0.0
    %1356 = vmatprep.subr.mxu0 0.0
    %1357 = vmatpush1.msra.mxu0 0.0
    %1358 = vmatprep.subr.mxu0 0.0
    %1359 = vmatpush1.msra.mxu0 0.0
    %1360 = vmatprep.subr.mxu0 0.0
    %1361 = vmatpush1.msra.mxu0 0.0
    %1362 = vmatprep.subr.mxu0 0.0
    %1363 = vmatpush1.msra.mxu0 0.0
    %1364 = vmatprep.subr.mxu0 0.0
    %1365 = vmatpush1.msra.mxu0 0.0
    %1366 = vmatprep.subr.mxu0 0.0
    %1367 = vmatpush1.msra.mxu0 0.0
    %1368 = vmatprep.subr.mxu0 0.0
    %1369 = vmatpush1.msra.mxu0 0.0
    %1370 = vmatprep.subr.mxu0 0.0
    %1371 = vmatpush1.msra.mxu0 0.0
    %1372 = vmatprep.subr.mxu0 0.0
    %1373 = vmatpush1.msra.mxu0 0.0
    %1374 = vmatprep.subr.mxu0 0.0
    %1375 = vmatpush1.msra.mxu0 0.0
    %1376 = vmatprep.mubr.f32.mxu0 0.0
    %1377 = vmatmul.mubr.f32.gmra.mrb[0].mxu0 %v1310
    %v1378 = vpop.f32.mrb[0].mxu0
    %v1379 = vadd.f32 0.0, %v1378
    %v1380 = vpop.f32.mrb[0].mxu0
    %1381 = vdwg.mxu0
    %1383 = vrot.lane.b32.xlu0 %v215, 64
    %v1384 = vpop.permute.xlu0 %1383
    %v1387 = vsel %vm831, %v917, 0
    %1389 = vmatprep.subr.mxu0 0.0
    %1390 = vmatpush1.msra.mxu0 %v1384
    %1391 = vmatprep.subr.mxu0 0.0
    %1392 = vmatpush1.msra.mxu0 0.0
    %1393 = vmatprep.subr.mxu0 0.0
    %1394 = vmatpush1.msra.mxu0 0.0
    %1395 = vmatprep.subr.mxu0 0.0
    %1396 = vmatpush1.msra.mxu0 0.0
    %1397 = vmatprep.subr.mxu0 0.0
    %1398 = vmatpush1.msra.mxu0 0.0
    %1399 = vmatprep.subr.mxu0 0.0
    %1400 = vmatpush1.msra.mxu0 0.0
    %1401 = vmatprep.subr.mxu0 0.0
    %1402 = vmatpush1.msra.mxu0 0.0
    %1403 = vmatprep.subr.mxu0 0.0
    %1404 = vmatpush1.msra.mxu0 0.0
    %1405 = vmatprep.subr.mxu0 0.0
    %1406 = vmatpush1.msra.mxu0 0.0
    %1407 = vmatprep.subr.mxu0 0.0
    %1408 = vmatpush1.msra.mxu0 0.0
    %1409 = vmatprep.subr.mxu0 0.0
    %1410 = vmatpush1.msra.mxu0 0.0
    %1411 = vmatprep.subr.mxu0 0.0
    %1412 = vmatpush1.msra.mxu0 0.0
    %1413 = vmatprep.subr.mxu0 0.0
    %1414 = vmatpush1.msra.mxu0 0.0
    %1415 = vmatprep.subr.mxu0 0.0
    %1416 = vmatpush1.msra.mxu0 0.0
    %1417 = vmatprep.subr.mxu0 0.0
    %1418 = vmatpush1.msra.mxu0 0.0
    %1419 = vmatprep.subr.mxu0 0.0
    %1420 = vmatpush1.msra.mxu0 0.0
    %1421 = vmatprep.subr.mxu0 0.0
    %1422 = vmatpush1.msra.mxu0 0.0
    %1423 = vmatprep.subr.mxu0 0.0
    %1424 = vmatpush1.msra.mxu0 0.0
    %1425 = vmatprep.subr.mxu0 0.0
    %1426 = vmatpush1.msra.mxu0 0.0
    %1427 = vmatprep.subr.mxu0 0.0
    %1428 = vmatpush1.msra.mxu0 0.0
    %1429 = vmatprep.subr.mxu0 0.0
    %1430 = vmatpush1.msra.mxu0 0.0
    %1431 = vmatprep.subr.mxu0 0.0
    %1432 = vmatpush1.msra.mxu0 0.0
    %1433 = vmatprep.subr.mxu0 0.0
    %1434 = vmatpush1.msra.mxu0 0.0
    %1435 = vmatprep.subr.mxu0 0.0
    %1436 = vmatpush1.msra.mxu0 0.0
    %1437 = vmatprep.subr.mxu0 0.0
    %1438 = vmatpush1.msra.mxu0 0.0
    %1439 = vmatprep.subr.mxu0 0.0
    %1440 = vmatpush1.msra.mxu0 0.0
    %1441 = vmatprep.subr.mxu0 0.0
    %1442 = vmatpush1.msra.mxu0 0.0
    %1443 = vmatprep.subr.mxu0 0.0
    %1444 = vmatpush1.msra.mxu0 0.0
    %1445 = vmatprep.subr.mxu0 0.0
    %1446 = vmatpush1.msra.mxu0 0.0
    %1447 = vmatprep.subr.mxu0 0.0
    %1448 = vmatpush1.msra.mxu0 0.0
    %1449 = vmatprep.subr.mxu0 0.0
    %1450 = vmatpush1.msra.mxu0 0.0
    %1451 = vmatprep.subr.mxu0 0.0
    %1452 = vmatpush1.msra.mxu0 0.0
    %1453 = vmatprep.mubr.f32.mxu0 0.0
    %1454 = vmatmul.mubr.f32.gmra.mrb[0].mxu0 %v1387
    %v1455 = vpop.f32.mrb[0].mxu0
    %v1456 = vadd.f32 0.0, %v1455
    %v1457 = vpop.f32.mrb[0].mxu0
    %1458 = vdwg.mxu0
    %1460 = vrot.lane.b32.xlu0 %v216, 64
    %v1461 = vpop.permute.xlu0 %1460
    %v1464 = vsel %vm831, %v919, 0
    %1466 = vmatprep.subr.mxu0 0.0
    %1467 = vmatpush1.msra.mxu0 %v1461
    %1468 = vmatprep.subr.mxu0 0.0
    %1469 = vmatpush1.msra.mxu0 0.0
    %1470 = vmatprep.subr.mxu0 0.0
    %1471 = vmatpush1.msra.mxu0 0.0
    %1472 = vmatprep.subr.mxu0 0.0
    %1473 = vmatpush1.msra.mxu0 0.0
    %1474 = vmatprep.subr.mxu0 0.0
    %1475 = vmatpush1.msra.mxu0 0.0
    %1476 = vmatprep.subr.mxu0 0.0
    %1477 = vmatpush1.msra.mxu0 0.0
    %1478 = vmatprep.subr.mxu0 0.0
    %1479 = vmatpush1.msra.mxu0 0.0
    %1480 = vmatprep.subr.mxu0 0.0
    %1481 = vmatpush1.msra.mxu0 0.0
    %1482 = vmatprep.subr.mxu0 0.0
    %1483 = vmatpush1.msra.mxu0 0.0
    %1484 = vmatprep.subr.mxu0 0.0
    %1485 = vmatpush1.msra.mxu0 0.0
    %1486 = vmatprep.subr.mxu0 0.0
    %1487 = vmatpush1.msra.mxu0 0.0
    %1488 = vmatprep.subr.mxu0 0.0
    %1489 = vmatpush1.msra.mxu0 0.0
    %1490 = vmatprep.subr.mxu0 0.0
    %1491 = vmatpush1.msra.mxu0 0.0
    %1492 = vmatprep.subr.mxu0 0.0
    %1493 = vmatpush1.msra.mxu0 0.0
    %1494 = vmatprep.subr.mxu0 0.0
    %1495 = vmatpush1.msra.mxu0 0.0
    %1496 = vmatprep.subr.mxu0 0.0
    %1497 = vmatpush1.msra.mxu0 0.0
    %1498 = vmatprep.subr.mxu0 0.0
    %1499 = vmatpush1.msra.mxu0 0.0
    %1500 = vmatprep.subr.mxu0 0.0
    %1501 = vmatpush1.msra.mxu0 0.0
    %1502 = vmatprep.subr.mxu0 0.0
    %1503 = vmatpush1.msra.mxu0 0.0
    %1504 = vmatprep.subr.mxu0 0.0
    %1505 = vmatpush1.msra.mxu0 0.0
    %1506 = vmatprep.subr.mxu0 0.0
    %1507 = vmatpush1.msra.mxu0 0.0
    %1508 = vmatprep.subr.mxu0 0.0
    %1509 = vmatpush1.msra.mxu0 0.0
    %1510 = vmatprep.subr.mxu0 0.0
    %1511 = vmatpush1.msra.mxu0 0.0
    %1512 = vmatprep.subr.mxu0 0.0
    %1513 = vmatpush1.msra.mxu0 0.0
    %1514 = vmatprep.subr.mxu0 0.0
    %1515 = vmatpush1.msra.mxu0 0.0
    %1516 = vmatprep.subr.mxu0 0.0
    %1517 = vmatpush1.msra.mxu0 0.0
    %1518 = vmatprep.subr.mxu0 0.0
    %1519 = vmatpush1.msra.mxu0 0.0
    %1520 = vmatprep.subr.mxu0 0.0
    %1521 = vmatpush1.msra.mxu0 0.0
    %1522 = vmatprep.subr.mxu0 0.0
    %1523 = vmatpush1.msra.mxu0 0.0
    %1524 = vmatprep.subr.mxu0 0.0
    %1525 = vmatpush1.msra.mxu0 0.0
    %1526 = vmatprep.subr.mxu0 0.0
    %1527 = vmatpush1.msra.mxu0 0.0
    %1528 = vmatprep.subr.mxu0 0.0
    %1529 = vmatpush1.msra.mxu0 0.0
    %1530 = vmatprep.mubr.f32.mxu0 0.0
    %1531 = vmatmul.mubr.f32.gmra.mrb[0].mxu0 %v1464
    %v1532 = vpop.f32.mrb[0].mxu0
    %v1533 = vadd.f32 0.0, %v1532
    %v1534 = vpop.f32.mrb[0].mxu0
    %1535 = vdwg.mxu0
    %v1536 = vsel %vm87, %v994, 0.0
    %v1537 = vsel %vm87, %v1071, 0.0
    %v1538 = vadd.f32 %v1536, %v1537
    %v1539 = vsel %vm87, %v1148, 0.0
    %v1540 = vadd.f32 %v1538, %v1539
    %v1541 = vsel %vm87, %v1225, 0.0
    %v1542 = vadd.f32 %v1540, %v1541
    %v1543 = vsel %vm87, %v1302, 0.0
    %v1544 = vsel %vm87, %v1379, 0.0
    %v1545 = vadd.f32 %v1543, %v1544
    %v1546 = vsel %vm87, %v1456, 0.0
    %v1547 = vadd.f32 %v1545, %v1546
    %v1548 = vsel %vm87, %v1533, 0.0
    %v1549 = vadd.f32 %v1547, %v1548
    %v1550 = vld [vmem:[#allocation7] sm:$0xff]
    %v1551 = vld [vmem:[#allocation7 + $0x8] sm:$0xff]
    %v1552 = vld [vmem:[#allocation7 + $0x10] sm:$0xff]
    %v1553 = vld [vmem:[#allocation7 + $0x18] sm:$0xff]
    %v1554 = vlaneseq
    %v1555 = vshrl.u32 %v1554, 7
    %v1556 = vsub.s32 1, %v1555
    %v1557 = vrot.slane %v78, %v1556
    %1562 = vrot.lane.b32.xlu0 %v1550, 32
    %v1563 = vpop.permute.xlu0 %1562
    %1564 = vrot.lane.b32.xlu0 %v1551, 32
    %v1565 = vpop.permute.xlu0 %1564
    %1566 = vrot.lane.b32.xlu0 %v1552, 32
    %v1567 = vpop.permute.xlu0 %1566
    %1568 = vrot.lane.b32.xlu0 %v1553, 32
    %v1569 = vpop.permute.xlu0 %1568
    %v1575 = vsel %vm87, %v1542, 0
    %v1578 = vsel %vm87, %v1549, 0
    %1580 = vmatprep.subr.mxu0 0.0
    %1581 = vmatpush1.msra.mxu0 %v1563
    %1582 = vmatprep.subr.mxu0 0.0
    %1583 = vmatpush1.msra.mxu0 %v1565
    %1584 = vmatprep.subr.mxu0 0.0
    %1585 = vmatpush1.msra.mxu0 %v1567
    %1586 = vmatprep.subr.mxu0 0.0
    %1587 = vmatpush1.msra.mxu0 %v1569
    %1588 = vmatprep.subr.mxu0 0.0
    %1589 = vmatpush1.msra.mxu0 0.0
    %1590 = vmatprep.subr.mxu0 0.0
    %1591 = vmatpush1.msra.mxu0 0.0
    %1592 = vmatprep.subr.mxu0 0.0
    %1593 = vmatpush1.msra.mxu0 0.0
    %1594 = vmatprep.subr.mxu0 0.0
    %1595 = vmatpush1.msra.mxu0 0.0
    %1596 = vmatprep.subr.mxu0 0.0
    %1597 = vmatpush1.msra.mxu0 0.0
    %1598 = vmatprep.subr.mxu0 0.0
    %1599 = vmatpush1.msra.mxu0 0.0
    %1600 = vmatprep.subr.mxu0 0.0
    %1601 = vmatpush1.msra.mxu0 0.0
    %1602 = vmatprep.subr.mxu0 0.0
    %1603 = vmatpush1.msra.mxu0 0.0
    %1604 = vmatprep.subr.mxu0 0.0
    %1605 = vmatpush1.msra.mxu0 0.0
    %1606 = vmatprep.subr.mxu0 0.0
    %1607 = vmatpush1.msra.mxu0 0.0
    %1608 = vmatprep.subr.mxu0 0.0
    %1609 = vmatpush1.msra.mxu0 0.0
    %1610 = vmatprep.subr.mxu0 0.0
    %1611 = vmatpush1.msra.mxu0 0.0
    %1612 = vmatprep.subr.mxu0 0.0
    %1613 = vmatpush1.msra.mxu0 0.0
    %1614 = vmatprep.subr.mxu0 0.0
    %1615 = vmatpush1.msra.mxu0 0.0
    %1616 = vmatprep.subr.mxu0 0.0
    %1617 = vmatpush1.msra.mxu0 0.0
    %1618 = vmatprep.subr.mxu0 0.0
    %1619 = vmatpush1.msra.mxu0 0.0
    %1620 = vmatprep.subr.mxu0 0.0
    %1621 = vmatpush1.msra.mxu0 0.0
    %1622 = vmatprep.subr.mxu0 0.0
    %1623 = vmatpush1.msra.mxu0 0.0
    %1624 = vmatprep.subr.mxu0 0.0
    %1625 = vmatpush1.msra.mxu0 0.0
    %1626 = vmatprep.subr.mxu0 0.0
    %1627 = vmatpush1.msra.mxu0 0.0
    %1628 = vmatprep.subr.mxu0 0.0
    %1629 = vmatpush1.msra.mxu0 0.0
    %1630 = vmatprep.subr.mxu0 0.0
    %1631 = vmatpush1.msra.mxu0 0.0
    %1632 = vmatprep.subr.mxu0 0.0
    %1633 = vmatpush1.msra.mxu0 0.0
    %1634 = vmatprep.subr.mxu0 0.0
    %1635 = vmatpush1.msra.mxu0 0.0
    %1636 = vmatprep.subr.mxu0 0.0
    %1637 = vmatpush1.msra.mxu0 0.0
    %1638 = vmatprep.subr.mxu0 0.0
    %1639 = vmatpush1.msra.mxu0 0.0
    %1640 = vmatprep.subr.mxu0 0.0
    %1641 = vmatpush1.msra.mxu0 0.0
    %1642 = vmatprep.subr.mxu0 0.0
    %1643 = vmatpush1.msra.mxu0 0.0
    %1644 = vmatprep.mubr.f32.mxu0 0.0
    %1645 = vmatmul.mubr.f32.gmra.mrb[0].mxu0 %v1575
    %v1646 = vpop.f32.mrb[0].mxu0
    %v1647 = vadd.f32 %v1557, %v1646
    %v1648 = vpop.f32.mrb[0].mxu0
    %1649 = vmatprep.mubr.f32.mxu0 0.0
    %1650 = vmatmul.mubr.f32.gmra.mrb[0].mxu0 %v1578
    %v1651 = vpop.f32.mrb[0].mxu0
    %v1652 = vadd.f32 %v1557, %v1651
    %v1653 = vpop.f32.mrb[0].mxu0
    %1654 = vdwg.mxu0
    %v1655 = vadd.f32 %v76, %v1647
    %v1656 = vadd.f32 %v77, %v1652
    %v1657 = vsel %vm87, %v1655, 0.0
    %1658 = vadd.xlane.f32.xlu0 %v1657
    %v1659 = vpop.xlane.xlu0 %1658
    %v1660 = vsel %vm87, %v1656, 0.0
    %1661 = vadd.xlane.f32.xlu0 %v1660
    %v1662 = vpop.xlane.xlu0 %1661
    %v1663 = vrcp.pop 32.0
    %v1664 = vmul.f32 %v1659, %v1663
    %v1665 = vmul.f32 %v1662, %v1663
    %v1666 = vsub.f32 %v1655, %v1664
    %v1667 = vsub.f32 %v1656, %v1665
    %v1668 = vmul.f32 %v1666, %v1666
    %v1669 = vmul.f32 %v1667, %v1667
    %v1670 = vsel %vm87, %v1668, 0.0
    %1671 = vadd.xlane.f32.xlu0 %v1670
    %v1672 = vpop.xlane.xlu0 %1671
    %v1673 = vsel %vm87, %v1669, 0.0
    %1674 = vadd.xlane.f32.xlu0 %v1673
    %v1675 = vpop.xlane.xlu0 %1674
    %v1676 = vmul.f32 %v1672, %v1663
    %v1677 = vmul.f32 %v1675, %v1663
    %v1678 = vadd.f32 %v1676, 1e-05
    %v1679 = vadd.f32 %v1677, 1e-05
    %v1680 = vrsqrt.pop %v1678
    %v1681 = vrsqrt.pop %v1679
    %v1682 = vmul.f32 %v1666, %v1680
    %v1683 = vmul.f32 %v1667, %v1681
    %v1684 = vlaneseq
    %v1685 = vshrl.u32 %v1684, 7
    %v1686 = vsub.s32 4, %v1685
    %v1687 = vrot.slane %v78, %v1686
    %v1688 = vmul.f32 %v1682, %v1687
    %v1689 = vmul.f32 %v1683, %v1687
    %v1690 = vlaneseq
    %v1691 = vshrl.u32 %v1690, 7
    %v1692 = vsub.s32 5, %v1691
    %v1693 = vrot.slane %v78, %v1692
    %v1694 = vadd.f32 %v1688, %v1693
    %v1695 = vadd.f32 %v1689, %v1693
    %v1696 = vld [vmem:[#allocation8] sm:$0xff]
    %v1697 = vld [vmem:[#allocation8 + $0x8] sm:$0xff]
    %v1698 = vld [vmem:[#allocation8 + $0x10] sm:$0xff]
    %v1699 = vld [vmem:[#allocation8 + $0x18] sm:$0xff]
    %v1700 = vlaneseq
    %v1701 = vshrl.u32 %v1700, 7
    %v1702 = vsub.s32 2, %v1701
    %v1703 = vrot.slane %v78, %v1702
    %v1705 = vsel %vm87, %v1694, 0
    %v1708 = vsel %vm87, %v1695, 0
    %1710 = vmatprep.subr.mxu0 0.0
    %1711 = vmatpush1.msra.mxu0 %v1696
    %1712 = vmatprep.subr.mxu0 0.0
    %1713 = vmatpush1.msra.mxu0 %v1697
    %1714 = vmatprep.subr.mxu0 0.0
    %1715 = vmatpush1.msra.mxu0 %v1698
    %1716 = vmatprep.subr.mxu0 0.0
    %1717 = vmatpush1.msra.mxu0 %v1699
    %1718 = vmatprep.subr.mxu0 0.0
    %1719 = vmatpush1.msra.mxu0 0.0
    %1720 = vmatprep.subr.mxu0 0.0
    %1721 = vmatpush1.msra.mxu0 0.0
    %1722 = vmatprep.subr.mxu0 0.0
    %1723 = vmatpush1.msra.mxu0 0.0
    %1724 = vmatprep.subr.mxu0 0.0
    %1725 = vmatpush1.msra.mxu0 0.0
    %1726 = vmatprep.subr.mxu0 0.0
    %1727 = vmatpush1.msra.mxu0 0.0
    %1728 = vmatprep.subr.mxu0 0.0
    %1729 = vmatpush1.msra.mxu0 0.0
    %1730 = vmatprep.subr.mxu0 0.0
    %1731 = vmatpush1.msra.mxu0 0.0
    %1732 = vmatprep.subr.mxu0 0.0
    %1733 = vmatpush1.msra.mxu0 0.0
    %1734 = vmatprep.subr.mxu0 0.0
    %1735 = vmatpush1.msra.mxu0 0.0
    %1736 = vmatprep.subr.mxu0 0.0
    %1737 = vmatpush1.msra.mxu0 0.0
    %1738 = vmatprep.subr.mxu0 0.0
    %1739 = vmatpush1.msra.mxu0 0.0
    %1740 = vmatprep.subr.mxu0 0.0
    %1741 = vmatpush1.msra.mxu0 0.0
    %1742 = vmatprep.subr.mxu0 0.0
    %1743 = vmatpush1.msra.mxu0 0.0
    %1744 = vmatprep.subr.mxu0 0.0
    %1745 = vmatpush1.msra.mxu0 0.0
    %1746 = vmatprep.subr.mxu0 0.0
    %1747 = vmatpush1.msra.mxu0 0.0
    %1748 = vmatprep.subr.mxu0 0.0
    %1749 = vmatpush1.msra.mxu0 0.0
    %1750 = vmatprep.subr.mxu0 0.0
    %1751 = vmatpush1.msra.mxu0 0.0
    %1752 = vmatprep.subr.mxu0 0.0
    %1753 = vmatpush1.msra.mxu0 0.0
    %1754 = vmatprep.subr.mxu0 0.0
    %1755 = vmatpush1.msra.mxu0 0.0
    %1756 = vmatprep.subr.mxu0 0.0
    %1757 = vmatpush1.msra.mxu0 0.0
    %1758 = vmatprep.subr.mxu0 0.0
    %1759 = vmatpush1.msra.mxu0 0.0
    %1760 = vmatprep.subr.mxu0 0.0
    %1761 = vmatpush1.msra.mxu0 0.0
    %1762 = vmatprep.subr.mxu0 0.0
    %1763 = vmatpush1.msra.mxu0 0.0
    %1764 = vmatprep.subr.mxu0 0.0
    %1765 = vmatpush1.msra.mxu0 0.0
    %1766 = vmatprep.subr.mxu0 0.0
    %1767 = vmatpush1.msra.mxu0 0.0
    %1768 = vmatprep.subr.mxu0 0.0
    %1769 = vmatpush1.msra.mxu0 0.0
    %1770 = vmatprep.subr.mxu0 0.0
    %1771 = vmatpush1.msra.mxu0 0.0
    %1772 = vmatprep.subr.mxu0 0.0
    %1773 = vmatpush1.msra.mxu0 0.0
    %1774 = vmatprep.mubr.f32.mxu0 0.0
    %1775 = vmatmul.mubr.f32.gmra.mrb[0].mxu0 %v1705
    %v1776 = vpop.f32.mrb[0].mxu0
    %v1777 = vadd.f32 %v1703, %v1776
    %v1778 = vpop.f32.mrb[0].mxu0
    %1779 = vmatprep.mubr.f32.mxu0 0.0
    %1780 = vmatmul.mubr.f32.gmra.mrb[0].mxu0 %v1708
    %v1781 = vpop.f32.mrb[0].mxu0
    %v1782 = vadd.f32 %v1703, %v1781
    %v1783 = vpop.f32.mrb[0].mxu0
    %1784 = vdwg.mxu0
    %v1785 = vmul.f32 %v1777, 0.5
    %v1786 = vmul.f32 %v1782, 0.5
    %v1787 = vmul.f32 %v1777, 0.70710677
    %v1788 = vmul.f32 %v1782, 0.70710677
    %v1789 = verf.f32.pop %v1787
    %v1790 = verf.f32.pop %v1788
    %v1791 = vadd.f32 %v1789, 1.0
    %v1792 = vadd.f32 %v1790, 1.0
    %v1793 = vmul.f32 %v1785, %v1791
    %v1794 = vmul.f32 %v1786, %v1792
    %v1795 = vld [vmem:[#allocation8 + $0x20] sm:$0xff]
    %v1796 = vld [vmem:[#allocation8 + $0x28] sm:$0xff]
    %v1797 = vld [vmem:[#allocation8 + $0x30] sm:$0xff]
    %v1798 = vld [vmem:[#allocation8 + $0x38] sm:$0xff]
    %v1799 = vlaneseq
    %v1800 = vshrl.u32 %v1799, 7
    %v1801 = vsub.s32 3, %v1800
    %v1802 = vrot.slane %v78, %v1801
    %1803 = vmatprep.subr.mxu0 0.0
    %1804 = vmatpush1.xpose.msra.mxu0 %v1795
    %1805 = vmatprep.subr.mxu0 0.0
    %1806 = vmatpush1.xpose.msra.mxu0 %v1796
    %1807 = vmatprep.subr.mxu0 0.0
    %1808 = vmatpush1.xpose.msra.mxu0 %v1797
    %1809 = vmatprep.subr.mxu0 0.0
    %1810 = vmatpush1.xpose.msra.mxu0 %v1798
    %1811 = vmatprep.subr.mxu0 0.0
    %1812 = vmatpush1.xpose.msra.mxu0 0.0
    %1813 = vmatprep.subr.mxu0 0.0
    %1814 = vmatpush1.xpose.msra.mxu0 0.0
    %1815 = vmatprep.subr.mxu0 0.0
    %1816 = vmatpush1.xpose.msra.mxu0 0.0
    %1817 = vmatprep.subr.mxu0 0.0
    %1818 = vmatpush1.xpose.msra.mxu0 0.0
    %1819 = vmatprep.subr.mxu0 0.0
    %1820 = vmatpush1.xpose.msra.mxu0 0.0
    %1821 = vmatprep.subr.mxu0 0.0
    %1822 = vmatpush1.xpose.msra.mxu0 0.0
    %1823 = vmatprep.subr.mxu0 0.0
    %1824 = vmatpush1.xpose.msra.mxu0 0.0
    %1825 = vmatprep.subr.mxu0 0.0
    %1826 = vmatpush1.xpose.msra.mxu0 0.0
    %1827 = vmatprep.subr.mxu0 0.0
    %1828 = vmatpush1.xpose.msra.mxu0 0.0
    %1829 = vmatprep.subr.mxu0 0.0
    %1830 = vmatpush1.xpose.msra.mxu0 0.0
    %1831 = vmatprep.subr.mxu0 0.0
    %1832 = vmatpush1.xpose.msra.mxu0 0.0
    %1833 = vmatprep.subr.mxu0 0.0
    %1834 = vmatpush1.xpose.msra.mxu0 0.0
    %1835 = vmatprep.subr.mxu0 0.0
    %1836 = vmatpush1.xpose.msra.mxu0 0.0
    %1837 = vmatprep.subr.mxu0 0.0
    %1838 = vmatpush1.xpose.msra.mxu0 0.0
    %1839 = vmatprep.subr.mxu0 0.0
    %1840 = vmatpush1.xpose.msra.mxu0 0.0
    %1841 = vmatprep.subr.mxu0 0.0
    %1842 = vmatpush1.xpose.msra.mxu0 0.0
    %1843 = vmatprep.subr.mxu0 0.0
    %1844 = vmatpush1.xpose.msra.mxu0 0.0
    %1845 = vmatprep.subr.mxu0 0.0
    %1846 = vmatpush1.xpose.msra.mxu0 0.0
    %1847 = vmatprep.subr.mxu0 0.0
    %1848 = vmatpush1.xpose.msra.mxu0 0.0
    %1849 = vmatprep.subr.mxu0 0.0
    %1850 = vmatpush1.xpose.msra.mxu0 0.0
    %1851 = vmatprep.subr.mxu0 0.0
    %1852 = vmatpush1.xpose.msra.mxu0 0.0
    %1853 = vmatprep.subr.mxu0 0.0
    %1854 = vmatpush1.xpose.msra.mxu0 0.0
    %1855 = vmatprep.subr.mxu0 0.0
    %1856 = vmatpush1.xpose.msra.mxu0 0.0
    %1857 = vmatprep.subr.mxu0 0.0
    %1858 = vmatpush1.xpose.msra.mxu0 0.0
    %1859 = vmatprep.subr.mxu0 0.0
    %1860 = vmatpush1.xpose.msra.mxu0 0.0
    %1861 = vmatprep.subr.mxu0 0.0
    %1862 = vmatpush1.xpose.msra.mxu0 0.0
    %1863 = vmatprep.subr.mxu0 0.0
    %1864 = vmatpush1.xpose.msra.mxu0 0.0
    %1865 = vmatprep.subr.mxu0 0.0
    %1866 = vmatpush1.xpose.msra.mxu0 0.0
    %1867 = vmatprep.mubr.f32.mxu0 0.0
    %1868 = vmatmul.mubr.f32.gmra.mrb[0].mxu0 %v1793
    %v1869 = vpop.f32.mrb[0].mxu0
    %v1870 = vadd.f32 %v1802, %v1869
    %v1871 = vpop.f32.mrb[0].mxu0
    %1872 = vmatprep.mubr.f32.mxu0 0.0
    %1873 = vmatmul.mubr.f32.gmra.mrb[0].mxu0 %v1794
    %v1874 = vpop.f32.mrb[0].mxu0
    %v1875 = vadd.f32 %v1802, %v1874
    %v1876 = vpop.f32.mrb[0].mxu0
    %1877 = vdwg.mxu0
    %v1878 = vadd.f32 %v1694, %v1870
    %v1879 = vadd.f32 %v1695, %v1875
    %v1880 = vsel %vm87, %v1878, 0.0
    %1881 = vadd.xlane.f32.xlu0 %v1880
    %v1882 = vpop.xlane.xlu0 %1881
    %v1883 = vsel %vm87, %v1879, 0.0
    %1884 = vadd.xlane.f32.xlu0 %v1883
    %v1885 = vpop.xlane.xlu0 %1884
    %v1886 = vmul.f32 %v1882, %v1663
    %v1887 = vmul.f32 %v1885, %v1663
    %v1888 = vsub.f32 %v1878, %v1886
    %v1889 = vsub.f32 %v1879, %v1887
    %v1890 = vmul.f32 %v1888, %v1888
    %v1891 = vmul.f32 %v1889, %v1889
    %v1892 = vsel %vm87, %v1890, 0.0
    %1893 = vadd.xlane.f32.xlu0 %v1892
    %v1894 = vpop.xlane.xlu0 %1893
    %v1895 = vsel %vm87, %v1891, 0.0
    %1896 = vadd.xlane.f32.xlu0 %v1895
    %v1897 = vpop.xlane.xlu0 %1896
    %v1898 = vmul.f32 %v1894, %v1663
    %v1899 = vmul.f32 %v1897, %v1663
    %v1900 = vadd.f32 %v1898, 1e-05
    %v1901 = vadd.f32 %v1899, 1e-05
    %v1902 = vrsqrt.pop %v1900
    %v1903 = vrsqrt.pop %v1901
    %v1904 = vmul.f32 %v1888, %v1902
    %v1905 = vmul.f32 %v1889, %v1903
    %v1906 = vlaneseq
    %v1907 = vshrl.u32 %v1906, 7
    %v1908 = vsub.s32 6, %v1907
    %v1909 = vrot.slane %v78, %v1908
    %v1910 = vmul.f32 %v1904, %v1909
    %v1911 = vmul.f32 %v1905, %v1909
    %v1912 = vlaneseq
    %v1913 = vshrl.u32 %v1912, 7
    %v1914 = vsub.s32 7, %v1913
    %v1915 = vrot.slane %v78, %v1914
    %v1916 = vadd.f32 %v1910, %v1915
    %v1917 = vadd.f32 %v1911, %v1915
    %1918 = vst.msk [vmem:[#allocation10] sm:$0xff] %vm87, %v1916
    %1919 = vst.msk [vmem:[#allocation10 + $0x8] sm:$0xff] %vm87, %v1917
    // Predicated region
    $region38: #{tpu_custom_call.1} parent=1 // pred_check
      _
    $region39: #{tpu_custom_call.1} parent=1 // pred_check_branch
      %1921 = sbr.rel (0) target = $region41
    $region40: #{tpu_custom_call.1} parent=1 // pred_region
      %s1923 = ssub.s32 256, 256
      %1924 = vsyncadd [#allocation4], %s1923
      %s1925 = sshll.u32 [#allocation10], 4
      %s1926 = int_to_ptr.vmem [resolvable:$true] %s1925
      %1931 = dma.vmem_to_hbm [thread:$0]  %s1926, 256, %s5, [#allocation4], 128, 128, 8
    $region41: #{tpu_custom_call.1} parent=1 // pred_fallthru
      _
    // Predicated region
    $region42: #{tpu_custom_call.1} parent=1 // pred_check
      _
    $region43: #{tpu_custom_call.1} parent=1 // pred_check_branch
      %1933 = sbr.rel (0) target = $region45
    $region44: #{tpu_custom_call.1} parent=1 // pred_region
      %1934 = dma.done [#allocation4], 256
    $region45: #{tpu_custom_call.1} parent=1 // pred_fallthru
      _
    %1935 = vsyncpa [#allocation3], 1
    %1936 = vsyncpa [#allocation6], 1
    %1937 = vsyncpa [#allocation9], 1
    %1938 = vsyncpa [#allocation4], 1

</llo_original>
